<compile_context>
chip_gen: v7x
topology: tpu7x:2x2x1
jax: 0.10.0
libtpu: 0.0.40
codegen_flags: <defaults>
</compile_context>

<pallas_src>
from collections import deque

import numpy as np
import jax
import jax.numpy as jnp
from jax import lax
from jax.experimental import pallas as pl
from jax.experimental.pallas import tpu as pltpu

NT_DIMS = (((1,), (1,)), ((), ()))   # A @ B^T (contract last dims of both)


# ----------------------------------------------------------------------------
# Shared math helpers (pure jnp; usable both inside kernels and in the ref)
# ----------------------------------------------------------------------------
def _layer_norm(h, g, b):
    mu = jnp.mean(h, axis=-1, keepdims=True)
    var = jnp.mean((h - mu) ** 2, axis=-1, keepdims=True)
    return (h - mu) * lax.rsqrt(var + 1e-5) * g + b


def _mm(a, b):
    # bf16 MXU operands, f32 accumulation (makes the DEFAULT MXU path explicit).
    return jnp.dot(a.astype(jnp.bfloat16), b.astype(jnp.bfloat16),
                   preferred_element_type=jnp.float32)


# ----------------------------------------------------------------------------
# Fused Graphormer kernel (one grid step == one graph)
# ----------------------------------------------------------------------------
def _graphormer_kernel(x_ref, cb_ref, bias_ref,
                       rep_ref, hmask_ref, csel_ref,
                       win_ref, ln1g_ref, ln1b_ref,
                       wqkv_ref, bqkv_ref, wo_ref, bo_ref,
                       ln2g_ref, ln2b_ref, wff_ref, bff_ref,
                       wout_ref, bout_ref,
                       o_ref):
    num_layers = wqkv_ref.shape[0]
    hd = wqkv_ref.shape[-1] // 3               # n_heads * head_dim (=128, lane aligned)

    rep = rep_ref[...]                          # (H*N, N)   0/1 row replicator
    hmask = hmask_ref[...]                      # (H*N, H*D) block-diagonal head mask
    csel = csel_ref[...]                        # (N, H*N)   0/1 head-row collapser
    bias_all = bias_ref[0]                      # (L, H*N, N) spatial + edge-path bias

    # node_in_lin + centrality encoding (input bias folded into cb on the host)
    x = _mm(x_ref[0], win_ref[...]) + cb_ref[0]                       # (N, D) f32

    for l in range(num_layers):                 # static unroll; stays in VMEM
        h = _layer_norm(x, ln1g_ref[l], ln1b_ref[l])
        qkv = _mm(h, wqkv_ref[l]) + bqkv_ref[l]                       # (N, 3*H*D)
        q = qkv[:, :hd]                         # 128-lane aligned slices (free)
        k = qkv[:, hd:2 * hd]                   # 1/sqrt(d) pre-folded into Wq / bq
        v = qkv[:, 2 * hd:]

        # Block-diagonal multi-head attention: heads live in the sublane dim of
        # the score matrix; only 2-D matmuls + 0/1-mask multiplies, no per-head
        # slicing / stacking / transposes.
        q_bd = _mm(rep, q) * hmask                                    # (H*N, H*D)
        s = lax.dot_general(q_bd.astype(jnp.bfloat16),
                            k.astype(jnp.bfloat16),
                            NT_DIMS, preferred_element_type=jnp.float32)
        s = s + bias_all[l]                                           # (H*N, N)
        s = s - jnp.max(s, axis=-1, keepdims=True)
        p = jnp.exp(s)
        p = p * pl.reciprocal(jnp.sum(p, axis=-1, keepdims=True), approx=True)
        ctx = _mm(p, v) * hmask                                       # (H*N, H*D)
        ctx = _mm(csel, ctx)                                          # (N, H*D) == concat heads
        x = _mm(ctx, wo_ref[l]) + bo_ref[l] + x                       # residual

        h2 = _layer_norm(x, ln2g_ref[l], ln2b_ref[l])
        # repo's encoder-layer FF is a single D->D linear (ff_dim unused)
        x = _mm(h2, wff_ref[l]) + bff_ref[l] + x                      # residual

    # node_out_lin, padded to a 128-lane-dense store (sliced back on the host)
    o_ref[...] = (_mm(x, wout_ref[...]) + bout_ref[...])[None]


def graphormer_pallas(x, cent_bias, bias_flat, consts, w, *, out_pad):
    G, N, _ = x.shape

    def per_graph(a):
        return pl.BlockSpec((1,) + a.shape[1:],
                            lambda g, nd=a.ndim: (g,) + (0,) * (nd - 1))

    def resident(a):  # constant index map -> stays VMEM-resident across the grid
        return pl.BlockSpec(a.shape, lambda g, nd=a.ndim: (0,) * nd)

    args = (x, cent_bias, bias_flat,
            consts["rep"], consts["hmask"], consts["csel"],
            w["win_t"], w["ln1_g"], w["ln1_b"],
            w["wqkv"], w["bqkv"], w["wo_t"], w["bo"],
            w["ln2_g"], w["ln2_b"], w["wff_t"], w["bff"],
            w["wout_t"], w["bout"])
    in_specs = [per_graph(x), per_graph(cent_bias), per_graph(bias_flat)]
    in_specs += [resident(a) for a in args[3:]]

    return pl.pallas_call(
        _graphormer_kernel,
        grid=(G,),
        in_specs=in_specs,
        out_specs=pl.BlockSpec((1, N, out_pad), lambda g: (g, 0, 0)),
        out_shape=jax.ShapeDtypeStruct((G, N, out_pad), jnp.float32),
        compiler_params=pltpu.CompilerParams(
            dimension_semantics=("parallel",)),
    )(*args)


# ----------------------------------------------------------------------------
# One-time packing: transposes, per-head stacking, scale folding, bf16 casts
# ----------------------------------------------------------------------------
def pack_params(node_in_w, node_in_b, node_out_w, node_out_b,
                raw_layers, n_heads, node_dim, out_pad):
    H, D = n_heads, node_dim
    scale = 1.0 / np.sqrt(D)
    bf16 = jnp.bfloat16

    def stack(fn):
        return jnp.stack([fn(lp) for lp in raw_layers])

    wqkv = stack(lambda lp: jnp.concatenate(
        [lp["wq"][h].T * scale for h in range(H)]
        + [lp["wk"][h].T for h in range(H)]
        + [lp["wv"][h].T for h in range(H)], axis=1))                 # (D, 3*H*D)
    bqkv = stack(lambda lp: jnp.concatenate(
        [lp["bq"][h] * scale for h in range(H)]
        + [lp["bk"][h] for h in range(H)]
        + [lp["bv"][h] for h in range(H)]).reshape(1, 3 * H * D))

    out_dim = node_out_w.shape[0]
    wout = jnp.zeros((D, out_pad), jnp.float32).at[:, :out_dim].set(node_out_w.T)
    bout = jnp.zeros((1, out_pad), jnp.float32).at[0, :out_dim].set(node_out_b)

    return dict(
        win_t=node_in_w.T.astype(bf16),
        ln1_g=stack(lambda lp: lp["ln1_g"].reshape(1, D)),
        ln1_b=stack(lambda lp: lp["ln1_b"].reshape(1, D)),
        wqkv=wqkv.astype(bf16),
        bqkv=bqkv,
        wo_t=stack(lambda lp: lp["wo"].T).astype(bf16),               # (L, H*D, D)
        bo=stack(lambda lp: lp["bo"].reshape(1, D)),
        ln2_g=stack(lambda lp: lp["ln2_g"].reshape(1, D)),
        ln2_b=stack(lambda lp: lp["ln2_b"].reshape(1, D)),
        wff_t=stack(lambda lp: lp["wff"].T).astype(bf16),             # (L, D, D)
        bff=stack(lambda lp: lp["bff"].reshape(1, D)),
        wout_t=wout.astype(bf16),                                     # (D, out_pad)
        bout=bout,
    )


def make_head_masks(n_heads, head_dim, n_nodes):
    H, D, N = n_heads, head_dim, n_nodes
    eye = np.eye(N, dtype=np.float32)
    rep = np.tile(eye, (H, 1))                       # (H*N, N)
    csel = np.tile(eye, (1, H))                      # (N, H*N)
    row_head = np.repeat(np.arange(H), N)
    col_head = np.repeat(np.arange(H), D)
    hmask = (row_head[:, None] == col_head[None, :]).astype(np.float32)  # (H*N, H*D)
    return dict(rep=jnp.asarray(rep), hmask=jnp.asarray(hmask),
                csel=jnp.asarray(csel))


# ----------------------------------------------------------------------------
# Host-side graph glue (shortest paths, degrees) -- matches PyG-repo semantics
# ----------------------------------------------------------------------------
# TODO(synk): exact node/edge path semantics of shortest_path_distance()
# (floyd_warshall variant) are reconstructed here with BFS; self-paths are [src].
def build_paths(n_nodes, edge_list):
    adj = {i: [] for i in range(n_nodes)}
    for eid, (u, v) in enumerate(edge_list):
        adj[u].append((v, eid))
    node_paths, edge_paths = {}, {}
    for src in range(n_nodes):
        prev = {src: (None, None)}
        dq = deque([src])
        while dq:
            u = dq.popleft()
            for (v, eid) in adj[u]:
                if v not in prev:
                    prev[v] = (u, eid)
                    dq.append(v)
        node_paths[src], edge_paths[src] = {}, {}
        for dst in prev:
            npth, epth, cur = [dst], [], dst
            while prev[cur][0] is not None:
                epth.append(prev[cur][1])
                cur = prev[cur][0]
                npth.append(cur)
            node_paths[src][dst] = list(reversed(npth))
            edge_paths[src][dst] = list(reversed(epth))
    return node_paths, edge_paths


# ----------------------------------------------------------------------------
# Main
# ----------------------------------------------------------------------------
if __name__ == "__main__":
    # Model hyper-parameters (small)
    num_layers = 2
    input_node_dim, node_dim = 8, 32
    input_edge_dim, edge_dim = 4, 16
    output_dim = 8
    n_heads = 4
    ff_dim = 64                    # unused by repo's encoder layer (ff is D->D)
    max_in_degree = max_out_degree = 8
    max_path_distance = 5
    n_graphs = 4                   # batched graphs -> grid axis ("parallel")
    OUT_PAD = 128                  # lane-dense padded output width

    # Synthetic topology shared by all graphs: 12-node ring + chords (both ways)
    n_nodes = 12
    undirected = [(i, (i + 1) % n_nodes) for i in range(n_nodes)] + [(0, 6), (2, 9), (3, 7)]
    edge_list = []
    for (u, v) in undirected:
        edge_list += [(u, v), (v, u)]
    n_edges = len(edge_list)

    key = jax.random.PRNGKey(0)
    ks = iter(jax.random.split(key, 256))

    def rn(shape, s=0.1):
        return s * jax.random.normal(next(ks), shape, jnp.float32)

    x_in = jax.random.normal(next(ks), (n_graphs, n_nodes, input_node_dim), jnp.float32)
    edge_attr_in = jax.random.normal(next(ks), (n_graphs, n_edges, input_edge_dim),
                                     jnp.float32)

    # --- parameters (deterministic, nn.Linear layout: weight (out, in)) ---
    node_in_w, node_in_b = rn((node_dim, input_node_dim)), rn((node_dim,))
    edge_in_w, edge_in_b = rn((edge_dim, input_edge_dim)), rn((edge_dim,))
    z_in = rn((max_in_degree, node_dim), 1.0)
    z_out = rn((max_out_degree, node_dim), 1.0)
    b_spatial = rn((max_path_distance,), 1.0)
    node_out_w, node_out_b = rn((output_dim, node_dim)), rn((output_dim,))

    raw_layers = []
    for _ in range(num_layers):
        raw_layers.append(dict(
            ln1_g=jnp.ones((node_dim,)), ln1_b=jnp.zeros((node_dim,)),
            ln2_g=jnp.ones((node_dim,)), ln2_b=jnp.zeros((node_dim,)),
            wq=rn((n_heads, node_dim, node_dim)), bq=rn((n_heads, node_dim)),
            wk=rn((n_heads, node_dim, node_dim)), bk=rn((n_heads, node_dim)),
            wv=rn((n_heads, node_dim, node_dim)), bv=rn((n_heads, node_dim)),
            wo=rn((node_dim, n_heads * node_dim)), bo=rn((node_dim,)),
            wff=rn((node_dim, node_dim)), bff=rn((node_dim,)),
            edge_vectors=rn((n_heads, max_path_distance, edge_dim), 1.0),
        ))

    packed = pack_params(node_in_w, node_in_b, node_out_w, node_out_b,
                         raw_layers, n_heads, node_dim, OUT_PAD)
    consts = make_head_masks(n_heads, node_dim, n_nodes)
    edge_wt = edge_in_w.T                                    # (in_edge, edge_dim)
    ev_all = jnp.stack([lp["edge_vectors"] for lp in raw_layers])   # (L, H, P, E)

    # --- host graph preprocessing (glue) ---
    node_paths, edge_paths = build_paths(n_nodes, edge_list)

    in_deg = np.zeros((n_nodes,), np.int32)
    out_deg = np.zeros((n_nodes,), np.int32)
    for (u, v) in edge_list:
        out_deg[u] += 1
        in_deg[v] += 1
    in_deg = np.minimum(in_deg, max_in_degree - 1)
    out_deg = np.minimum(out_deg, max_out_degree - 1)
    cent = z_in[jnp.asarray(in_deg)] + z_out[jnp.asarray(out_deg)]       # (N, D)
    cent_bias = jnp.broadcast_to(cent + node_in_b,
                                 (n_graphs, n_nodes, node_dim))          # (G, N, D)

    b_sp_np = np.asarray(b_spatial)
    b_mat_np = np.zeros((n_nodes, n_nodes), np.float32)
    for src in node_paths:
        for dst in node_paths[src]:
            L = min(len(node_paths[src][dst]), max_path_distance)
            b_mat_np[src, dst] = b_sp_np[L - 1]
    b_mat = jnp.asarray(b_mat_np)

    P = max_path_distance
    path_ids_np = np.zeros((n_nodes, n_nodes, P), np.int32)
    path_mask_np = np.zeros((n_nodes, n_nodes, P), np.float32)
    for src in edge_paths:
        for dst in edge_paths[src]:
            for i, e in enumerate(edge_paths[src][dst][:P]):
                path_ids_np[src, dst, i] = e
                path_mask_np[src, dst, i] = 1.0
    cnt = path_mask_np.sum(axis=-1)
    inv_cnt = np.where(cnt > 0, 1.0 / np.maximum(cnt, 1.0), 0.0).astype(np.float32)
    path_ids = jnp.asarray(path_ids_np)
    path_scale = jnp.asarray(path_mask_np * inv_cnt[:, :, None])         # mask / cnt

    # --- Pallas forward: ONE pallas_call; edge linear / gather / bias in XLA ---
    @jax.jit
    def forward_pallas(x, edge_attr):
        ea = jnp.dot(edge_attr, edge_wt) + edge_in_b                     # (G, E, edge_dim)
        gathered = ea[:, path_ids] * path_scale[None, :, :, :, None]     # (G, N, N, P, E)
        eenc = jnp.einsum('gnmpe,lhpe->glhnm', gathered, ev_all)         # (G, L, H, N, N)
        bias = b_mat[None, None, None] + eenc
        bias_flat = bias.reshape(bias.shape[0], bias.shape[1], -1, bias.shape[-1])
        out = graphormer_pallas(x, cent_bias, bias_flat, consts, packed,
                                out_pad=OUT_PAD)
        return out[..., :output_dim]

    # --- pure-JAX f32 reference (HIGHEST precision ground truth), per graph ---
    def forward_ref(xg, eag):
        HP = lax.Precision.HIGHEST

        def dot(a, b):
            return jnp.dot(a, b, precision=HP)

        x = dot(xg, node_in_w.T) + node_in_b + cent
        ea = dot(eag, edge_in_w.T) + edge_in_b
        for lp in raw_layers:
            gathered = ea[path_ids] * path_scale[..., None]
            c = jnp.einsum('nmpe,hpe->hnm', gathered, lp["edge_vectors"],
                           precision=HP)
            bias = b_mat[None] + c
            h = _layer_norm(x, lp["ln1_g"], lp["ln1_b"])
            heads = []
            for hh in range(n_heads):
                q = dot(h, lp["wq"][hh].T) + lp["bq"][hh]
                k = dot(h, lp["wk"][hh].T) + lp["bk"][hh]
                v = dot(h, lp["wv"][hh].T) + lp["bv"][hh]
                a = dot(q, k.T) / jnp.sqrt(jnp.float32(node_dim)) + bias[hh]
                heads.append(dot(jax.nn.softmax(a, axis=-1), v))
            cat = jnp.concatenate(heads, axis=-1)
            x = dot(cat, lp["wo"].T) + lp["bo"] + x
            h2 = _layer_norm(x, lp["ln2_g"], lp["ln2_b"])
            x = dot(h2, lp["wff"].T) + lp["bff"] + x
        return dot(x, node_out_w.T) + node_out_b

    out = jax.block_until_ready(forward_pallas(x_in, edge_attr_in))
    ref = jax.block_until_ready(
        jnp.stack([forward_ref(x_in[g], edge_attr_in[g]) for g in range(n_graphs)]))

    assert out.shape == (n_graphs, n_nodes, output_dim), out.shape
    # Kernel runs bf16-MXU / f32-accum with an EUP approx reciprocal in the
    # softmax; reference is f32 HIGHEST -> compare at 3e-2.
    np.testing.assert_allclose(np.asarray(out), np.asarray(ref), rtol=3e-2, atol=3e-2)
    print("KERNEL_OK")
</pallas_src>

<mosaic_0001>
module attributes {stable_mosaic.version = 11 : i64} {
  func.func @_graphormer_kernel(%arg0: i32, %arg1: memref<1x12x8xf32, #tpu.memory_space<vmem>>, %arg2: memref<1x12x32xf32, #tpu.memory_space<vmem>>, %arg3: memref<1x2x48x12xf32, #tpu.memory_space<vmem>>, %arg4: memref<48x12xf32, #tpu.memory_space<vmem>>, %arg5: memref<48x128xf32, #tpu.memory_space<vmem>>, %arg6: memref<12x48xf32, #tpu.memory_space<vmem>>, %arg7: memref<8x32xbf16, #tpu.memory_space<vmem>>, %arg8: memref<2x1x32xf32, #tpu.memory_space<vmem>>, %arg9: memref<2x1x32xf32, #tpu.memory_space<vmem>>, %arg10: memref<2x32x384xbf16, #tpu.memory_space<vmem>>, %arg11: memref<2x1x384xf32, #tpu.memory_space<vmem>>, %arg12: memref<2x128x32xbf16, #tpu.memory_space<vmem>>, %arg13: memref<2x1x32xf32, #tpu.memory_space<vmem>>, %arg14: memref<2x1x32xf32, #tpu.memory_space<vmem>>, %arg15: memref<2x1x32xf32, #tpu.memory_space<vmem>>, %arg16: memref<2x32x32xbf16, #tpu.memory_space<vmem>>, %arg17: memref<2x1x32xf32, #tpu.memory_space<vmem>>, %arg18: memref<32x128xbf16, #tpu.memory_space<vmem>>, %arg19: memref<1x128xf32, #tpu.memory_space<vmem>>, %arg20: memref<1x12x128xf32, #tpu.memory_space<vmem>>) attributes {dimension_semantics = [#tpu.dimension_semantics<parallel>], iteration_bounds = array<i64: 4>, scalar_prefetch = 0 : i64, scratch_operands = 0 : i64, tpu.core_type = #tpu.core_type<tc>, window_params = [{transform_indices = @transform_0, window_bounds = array<i64: 1, 12, 8>}, {transform_indices = @transform_1, window_bounds = array<i64: 1, 12, 32>}, {transform_indices = @transform_2, window_bounds = array<i64: 1, 2, 48, 12>}, {pipeline_mode = #tpu.pipeline_mode<synchronous>, transform_indices = @transform_3, window_bounds = array<i64: 48, 12>}, {pipeline_mode = #tpu.pipeline_mode<synchronous>, transform_indices = @transform_4, window_bounds = array<i64: 48, 128>}, {pipeline_mode = #tpu.pipeline_mode<synchronous>, transform_indices = @transform_5, window_bounds = array<i64: 12, 48>}, {pipeline_mode = #tpu.pipeline_mode<synchronous>, transform_indices = @transform_6, window_bounds = array<i64: 8, 32>}, {pipeline_mode = #tpu.pipeline_mode<synchronous>, transform_indices = @transform_7, window_bounds = array<i64: 2, 1, 32>}, {pipeline_mode = #tpu.pipeline_mode<synchronous>, transform_indices = @transform_8, window_bounds = array<i64: 2, 1, 32>}, {pipeline_mode = #tpu.pipeline_mode<synchronous>, transform_indices = @transform_9, window_bounds = array<i64: 2, 32, 384>}, {pipeline_mode = #tpu.pipeline_mode<synchronous>, transform_indices = @transform_10, window_bounds = array<i64: 2, 1, 384>}, {pipeline_mode = #tpu.pipeline_mode<synchronous>, transform_indices = @transform_11, window_bounds = array<i64: 2, 128, 32>}, {pipeline_mode = #tpu.pipeline_mode<synchronous>, transform_indices = @transform_12, window_bounds = array<i64: 2, 1, 32>}, {pipeline_mode = #tpu.pipeline_mode<synchronous>, transform_indices = @transform_13, window_bounds = array<i64: 2, 1, 32>}, {pipeline_mode = #tpu.pipeline_mode<synchronous>, transform_indices = @transform_14, window_bounds = array<i64: 2, 1, 32>}, {pipeline_mode = #tpu.pipeline_mode<synchronous>, transform_indices = @transform_15, window_bounds = array<i64: 2, 32, 32>}, {pipeline_mode = #tpu.pipeline_mode<synchronous>, transform_indices = @transform_16, window_bounds = array<i64: 2, 1, 32>}, {pipeline_mode = #tpu.pipeline_mode<synchronous>, transform_indices = @transform_17, window_bounds = array<i64: 32, 128>}, {pipeline_mode = #tpu.pipeline_mode<synchronous>, transform_indices = @transform_18, window_bounds = array<i64: 1, 128>}, {transform_indices = @transform_19, window_bounds = array<i64: 1, 12, 128>}]} {
    %c0 = arith.constant 0 : index
    %c0_0 = arith.constant 0 : index
    %0 = vector.load %arg4[%c0, %c0_0] : memref<48x12xf32, #tpu.memory_space<vmem>>, vector<48x12xf32>
    %c0_1 = arith.constant 0 : index
    %c0_2 = arith.constant 0 : index
    %1 = vector.load %arg5[%c0_1, %c0_2] : memref<48x128xf32, #tpu.memory_space<vmem>>, vector<48x128xf32>
    %c0_3 = arith.constant 0 : index
    %c0_4 = arith.constant 0 : index
    %2 = vector.load %arg6[%c0_3, %c0_4] : memref<12x48xf32, #tpu.memory_space<vmem>>, vector<12x48xf32>
    %c0_5 = arith.constant 0 : index
    %c0_6 = arith.constant 0 : index
    %c0_7 = arith.constant 0 : index
    %c0_8 = arith.constant 0 : index
    %3 = vector.load %arg3[%c0_5, %c0_6, %c0_7, %c0_8] : memref<1x2x48x12xf32, #tpu.memory_space<vmem>>, vector<1x2x48x12xf32>
    %4 = vector.shape_cast %3 : vector<1x2x48x12xf32> to vector<2x48x12xf32>
    %c0_9 = arith.constant 0 : index
    %c0_10 = arith.constant 0 : index
    %c0_11 = arith.constant 0 : index
    %5 = vector.load %arg1[%c0_9, %c0_10, %c0_11] : memref<1x12x8xf32, #tpu.memory_space<vmem>>, vector<1x12x8xf32>
    %6 = vector.shape_cast %5 : vector<1x12x8xf32> to vector<12x8xf32>
    %c0_12 = arith.constant 0 : index
    %c0_13 = arith.constant 0 : index
    %7 = vector.load %arg7[%c0_12, %c0_13] : memref<8x32xbf16, #tpu.memory_space<vmem>>, vector<8x32xbf16>
    %8 = arith.truncf %6 : vector<12x8xf32> to vector<12x8xbf16>
    %cst = arith.constant dense<0.000000e+00> : vector<12x32xf32>
    %9 = tpu.matmul %8, %7, %cst {dimension_numbers = #tpu.dot_dimension_numbers<[1], [0], [0], [1], [0, 0, 1, 1], [], []>} : vector<12x8xbf16>, vector<8x32xbf16>, vector<12x32xf32> -> vector<12x32xf32>
    %c0_14 = arith.constant 0 : index
    %c0_15 = arith.constant 0 : index
    %c0_16 = arith.constant 0 : index
    %10 = vector.load %arg2[%c0_14, %c0_15, %c0_16] : memref<1x12x32xf32, #tpu.memory_space<vmem>>, vector<1x12x32xf32>
    %11 = vector.shape_cast %10 : vector<1x12x32xf32> to vector<12x32xf32>
    %12 = arith.addf %9, %11 : vector<12x32xf32>
    %c0_17 = arith.constant 0 : index
    %c0_18 = arith.constant 0 : index
    %c0_19 = arith.constant 0 : index
    %13 = vector.load %arg8[%c0_17, %c0_18, %c0_19] : memref<2x1x32xf32, #tpu.memory_space<vmem>>, vector<1x1x32xf32>
    %14 = vector.shape_cast %13 : vector<1x1x32xf32> to vector<1x32xf32>
    %c0_20 = arith.constant 0 : index
    %c0_21 = arith.constant 0 : index
    %c0_22 = arith.constant 0 : index
    %15 = vector.load %arg9[%c0_20, %c0_21, %c0_22] : memref<2x1x32xf32, #tpu.memory_space<vmem>>, vector<1x1x32xf32>
    %16 = vector.shape_cast %15 : vector<1x1x32xf32> to vector<1x32xf32>
    %cst_23 = arith.constant dense<0.000000e+00> : vector<12xf32>
    %17 = vector.multi_reduction <add>, %12, %cst_23 [1] : vector<12x32xf32> to vector<12xf32>
    %18 = vector.shape_cast %17 : vector<12xf32> to vector<12x1xf32>
    %cst_24 = arith.constant 3.200000e+01 : f32
    %19 = vector.broadcast %cst_24 : f32 to vector<12x1xf32>
    %20 = arith.divf %18, %19 : vector<12x1xf32>
    %21 = vector.broadcast %20 : vector<12x1xf32> to vector<12x32xf32>
    %22 = arith.subf %12, %21 : vector<12x32xf32>
    %23 = arith.mulf %22, %22 : vector<12x32xf32>
    %cst_25 = arith.constant dense<0.000000e+00> : vector<12xf32>
    %24 = vector.multi_reduction <add>, %23, %cst_25 [1] : vector<12x32xf32> to vector<12xf32>
    %25 = vector.shape_cast %24 : vector<12xf32> to vector<12x1xf32>
    %cst_26 = arith.constant 3.200000e+01 : f32
    %26 = vector.broadcast %cst_26 : f32 to vector<12x1xf32>
    %27 = arith.divf %25, %26 : vector<12x1xf32>
    %28 = vector.broadcast %20 : vector<12x1xf32> to vector<12x32xf32>
    %29 = arith.subf %12, %28 : vector<12x32xf32>
    %cst_27 = arith.constant 9.99999974E-6 : f32
    %30 = vector.broadcast %cst_27 : f32 to vector<12x1xf32>
    %31 = arith.addf %27, %30 : vector<12x1xf32>
    %32 = math.rsqrt %31 : vector<12x1xf32>
    %33 = vector.broadcast %32 : vector<12x1xf32> to vector<12x32xf32>
    %34 = arith.mulf %29, %33 : vector<12x32xf32>
    %35 = vector.broadcast %14 : vector<1x32xf32> to vector<12x32xf32>
    %36 = arith.mulf %34, %35 : vector<12x32xf32>
    %37 = vector.broadcast %16 : vector<1x32xf32> to vector<12x32xf32>
    %38 = arith.addf %36, %37 : vector<12x32xf32>
    %c0_28 = arith.constant 0 : index
    %c0_29 = arith.constant 0 : index
    %c0_30 = arith.constant 0 : index
    %39 = vector.load %arg10[%c0_28, %c0_29, %c0_30] : memref<2x32x384xbf16, #tpu.memory_space<vmem>>, vector<1x32x384xbf16>
    %40 = vector.shape_cast %39 : vector<1x32x384xbf16> to vector<32x384xbf16>
    %41 = arith.truncf %38 : vector<12x32xf32> to vector<12x32xbf16>
    %cst_31 = arith.constant dense<0.000000e+00> : vector<12x384xf32>
    %42 = tpu.matmul %41, %40, %cst_31 {dimension_numbers = #tpu.dot_dimension_numbers<[1], [0], [0], [1], [0, 0, 1, 1], [], []>} : vector<12x32xbf16>, vector<32x384xbf16>, vector<12x384xf32> -> vector<12x384xf32>
    %c0_32 = arith.constant 0 : index
    %c0_33 = arith.constant 0 : index
    %c0_34 = arith.constant 0 : index
    %43 = vector.load %arg11[%c0_32, %c0_33, %c0_34] : memref<2x1x384xf32, #tpu.memory_space<vmem>>, vector<1x1x384xf32>
    %44 = vector.shape_cast %43 : vector<1x1x384xf32> to vector<1x384xf32>
    %45 = vector.broadcast %44 : vector<1x384xf32> to vector<12x384xf32>
    %46 = arith.addf %42, %45 : vector<12x384xf32>
    %47 = vector.extract_strided_slice %46 {offsets = [0, 0], sizes = [12, 128], strides = [1, 1]} : vector<12x384xf32> to vector<12x128xf32>
    %48 = vector.extract_strided_slice %46 {offsets = [0, 128], sizes = [12, 128], strides = [1, 1]} : vector<12x384xf32> to vector<12x128xf32>
    %49 = vector.extract_strided_slice %46 {offsets = [0, 256], sizes = [12, 128], strides = [1, 1]} : vector<12x384xf32> to vector<12x128xf32>
    %50 = arith.truncf %0 : vector<48x12xf32> to vector<48x12xbf16>
    %51 = arith.truncf %47 : vector<12x128xf32> to vector<12x128xbf16>
    %cst_35 = arith.constant dense<0.000000e+00> : vector<48x128xf32>
    %52 = tpu.matmul %50, %51, %cst_35 {dimension_numbers = #tpu.dot_dimension_numbers<[1], [0], [0], [1], [0, 0, 1, 1], [], []>} : vector<48x12xbf16>, vector<12x128xbf16>, vector<48x128xf32> -> vector<48x128xf32>
    %53 = arith.mulf %52, %1 : vector<48x128xf32>
    %54 = arith.truncf %53 : vector<48x128xf32> to vector<48x128xbf16>
    %55 = arith.truncf %48 : vector<12x128xf32> to vector<12x128xbf16>
    %cst_36 = arith.constant dense<0.000000e+00> : vector<48x12xf32>
    %56 = tpu.matmul %54, %55, %cst_36 {dimension_numbers = #tpu.dot_dimension_numbers<[1], [1], [0], [0], [0, 0, 1, 0], [], []>} : vector<48x128xbf16>, vector<12x128xbf16>, vector<48x12xf32> -> vector<48x12xf32>
    %57 = vector.extract_strided_slice %4 {offsets = [0, 0, 0], sizes = [1, 48, 12], strides = [1, 1, 1]} : vector<2x48x12xf32> to vector<1x48x12xf32>
    %58 = vector.shape_cast %57 : vector<1x48x12xf32> to vector<48x12xf32>
    %59 = arith.addf %56, %58 : vector<48x12xf32>
    %cst_37 = arith.constant dense<0xFF800000> : vector<48xf32>
    %60 = vector.multi_reduction <maximumf>, %59, %cst_37 [1] : vector<48x12xf32> to vector<48xf32>
    %61 = vector.shape_cast %60 : vector<48xf32> to vector<48x1xf32>
    %62 = vector.broadcast %61 : vector<48x1xf32> to vector<48x12xf32>
    %63 = arith.subf %59, %62 : vector<48x12xf32>
    %64 = math.exp %63 : vector<48x12xf32>
    %cst_38 = arith.constant dense<0.000000e+00> : vector<48xf32>
    %65 = vector.multi_reduction <add>, %64, %cst_38 [1] : vector<48x12xf32> to vector<48xf32>
    %66 = vector.shape_cast %65 : vector<48xf32> to vector<48x1xf32>
    %67 = tpu.reciprocal %66 {approx = true} : vector<48x1xf32> -> vector<48x1xf32>
    %68 = vector.broadcast %67 : vector<48x1xf32> to vector<48x12xf32>
    %69 = arith.mulf %64, %68 : vector<48x12xf32>
    %70 = arith.truncf %69 : vector<48x12xf32> to vector<48x12xbf16>
    %71 = arith.truncf %49 : vector<12x128xf32> to vector<12x128xbf16>
    %cst_39 = arith.constant dense<0.000000e+00> : vector<48x128xf32>
    %72 = tpu.matmul %70, %71, %cst_39 {dimension_numbers = #tpu.dot_dimension_numbers<[1], [0], [0], [1], [0, 0, 1, 1], [], []>} : vector<48x12xbf16>, vector<12x128xbf16>, vector<48x128xf32> -> vector<48x128xf32>
    %73 = arith.mulf %72, %1 : vector<48x128xf32>
    %74 = arith.truncf %2 : vector<12x48xf32> to vector<12x48xbf16>
    %75 = arith.truncf %73 : vector<48x128xf32> to vector<48x128xbf16>
    %cst_40 = arith.constant dense<0.000000e+00> : vector<12x128xf32>
    %76 = tpu.matmul %74, %75, %cst_40 {dimension_numbers = #tpu.dot_dimension_numbers<[1], [0], [0], [1], [0, 0, 1, 1], [], []>} : vector<12x48xbf16>, vector<48x128xbf16>, vector<12x128xf32> -> vector<12x128xf32>
    %c0_41 = arith.constant 0 : index
    %c0_42 = arith.constant 0 : index
    %c0_43 = arith.constant 0 : index
    %77 = vector.load %arg12[%c0_41, %c0_42, %c0_43] : memref<2x128x32xbf16, #tpu.memory_space<vmem>>, vector<1x128x32xbf16>
    %78 = vector.shape_cast %77 : vector<1x128x32xbf16> to vector<128x32xbf16>
    %79 = arith.truncf %76 : vector<12x128xf32> to vector<12x128xbf16>
    %cst_44 = arith.constant dense<0.000000e+00> : vector<12x32xf32>
    %80 = tpu.matmul %79, %78, %cst_44 {dimension_numbers = #tpu.dot_dimension_numbers<[1], [0], [0], [1], [0, 0, 1, 1], [], []>} : vector<12x128xbf16>, vector<128x32xbf16>, vector<12x32xf32> -> vector<12x32xf32>
    %c0_45 = arith.constant 0 : index
    %c0_46 = arith.constant 0 : index
    %c0_47 = arith.constant 0 : index
    %81 = vector.load %arg13[%c0_45, %c0_46, %c0_47] : memref<2x1x32xf32, #tpu.memory_space<vmem>>, vector<1x1x32xf32>
    %82 = vector.shape_cast %81 : vector<1x1x32xf32> to vector<1x32xf32>
    %83 = vector.broadcast %82 : vector<1x32xf32> to vector<12x32xf32>
    %84 = arith.addf %80, %83 : vector<12x32xf32>
    %85 = arith.addf %84, %12 : vector<12x32xf32>
    %c0_48 = arith.constant 0 : index
    %c0_49 = arith.constant 0 : index
    %c0_50 = arith.constant 0 : index
    %86 = vector.load %arg14[%c0_48, %c0_49, %c0_50] : memref<2x1x32xf32, #tpu.memory_space<vmem>>, vector<1x1x32xf32>
    %87 = vector.shape_cast %86 : vector<1x1x32xf32> to vector<1x32xf32>
    %c0_51 = arith.constant 0 : index
    %c0_52 = arith.constant 0 : index
    %c0_53 = arith.constant 0 : index
    %88 = vector.load %arg15[%c0_51, %c0_52, %c0_53] : memref<2x1x32xf32, #tpu.memory_space<vmem>>, vector<1x1x32xf32>
    %89 = vector.shape_cast %88 : vector<1x1x32xf32> to vector<1x32xf32>
    %cst_54 = arith.constant dense<0.000000e+00> : vector<12xf32>
    %90 = vector.multi_reduction <add>, %85, %cst_54 [1] : vector<12x32xf32> to vector<12xf32>
    %91 = vector.shape_cast %90 : vector<12xf32> to vector<12x1xf32>
    %cst_55 = arith.constant 3.200000e+01 : f32
    %92 = vector.broadcast %cst_55 : f32 to vector<12x1xf32>
    %93 = arith.divf %91, %92 : vector<12x1xf32>
    %94 = vector.broadcast %93 : vector<12x1xf32> to vector<12x32xf32>
    %95 = arith.subf %85, %94 : vector<12x32xf32>
    %96 = arith.mulf %95, %95 : vector<12x32xf32>
    %cst_56 = arith.constant dense<0.000000e+00> : vector<12xf32>
    %97 = vector.multi_reduction <add>, %96, %cst_56 [1] : vector<12x32xf32> to vector<12xf32>
    %98 = vector.shape_cast %97 : vector<12xf32> to vector<12x1xf32>
    %cst_57 = arith.constant 3.200000e+01 : f32
    %99 = vector.broadcast %cst_57 : f32 to vector<12x1xf32>
    %100 = arith.divf %98, %99 : vector<12x1xf32>
    %101 = vector.broadcast %93 : vector<12x1xf32> to vector<12x32xf32>
    %102 = arith.subf %85, %101 : vector<12x32xf32>
    %cst_58 = arith.constant 9.99999974E-6 : f32
    %103 = vector.broadcast %cst_58 : f32 to vector<12x1xf32>
    %104 = arith.addf %100, %103 : vector<12x1xf32>
    %105 = math.rsqrt %104 : vector<12x1xf32>
    %106 = vector.broadcast %105 : vector<12x1xf32> to vector<12x32xf32>
    %107 = arith.mulf %102, %106 : vector<12x32xf32>
    %108 = vector.broadcast %87 : vector<1x32xf32> to vector<12x32xf32>
    %109 = arith.mulf %107, %108 : vector<12x32xf32>
    %110 = vector.broadcast %89 : vector<1x32xf32> to vector<12x32xf32>
    %111 = arith.addf %109, %110 : vector<12x32xf32>
    %c0_59 = arith.constant 0 : index
    %c0_60 = arith.constant 0 : index
    %c0_61 = arith.constant 0 : index
    %112 = vector.load %arg16[%c0_59, %c0_60, %c0_61] : memref<2x32x32xbf16, #tpu.memory_space<vmem>>, vector<1x32x32xbf16>
    %113 = vector.shape_cast %112 : vector<1x32x32xbf16> to vector<32x32xbf16>
    %114 = arith.truncf %111 : vector<12x32xf32> to vector<12x32xbf16>
    %cst_62 = arith.constant dense<0.000000e+00> : vector<12x32xf32>
    %115 = tpu.matmul %114, %113, %cst_62 {dimension_numbers = #tpu.dot_dimension_numbers<[1], [0], [0], [1], [0, 0, 1, 1], [], []>} : vector<12x32xbf16>, vector<32x32xbf16>, vector<12x32xf32> -> vector<12x32xf32>
    %c0_63 = arith.constant 0 : index
    %c0_64 = arith.constant 0 : index
    %c0_65 = arith.constant 0 : index
    %116 = vector.load %arg17[%c0_63, %c0_64, %c0_65] : memref<2x1x32xf32, #tpu.memory_space<vmem>>, vector<1x1x32xf32>
    %117 = vector.shape_cast %116 : vector<1x1x32xf32> to vector<1x32xf32>
    %118 = vector.broadcast %117 : vector<1x32xf32> to vector<12x32xf32>
    %119 = arith.addf %115, %118 : vector<12x32xf32>
    %120 = arith.addf %119, %85 : vector<12x32xf32>
    %c1 = arith.constant 1 : index
    %c0_66 = arith.constant 0 : index
    %c0_67 = arith.constant 0 : index
    %121 = vector.load %arg8[%c1, %c0_66, %c0_67] : memref<2x1x32xf32, #tpu.memory_space<vmem>>, vector<1x1x32xf32>
    %122 = vector.shape_cast %121 : vector<1x1x32xf32> to vector<1x32xf32>
    %c1_68 = arith.constant 1 : index
    %c0_69 = arith.constant 0 : index
    %c0_70 = arith.constant 0 : index
    %123 = vector.load %arg9[%c1_68, %c0_69, %c0_70] : memref<2x1x32xf32, #tpu.memory_space<vmem>>, vector<1x1x32xf32>
    %124 = vector.shape_cast %123 : vector<1x1x32xf32> to vector<1x32xf32>
    %cst_71 = arith.constant dense<0.000000e+00> : vector<12xf32>
    %125 = vector.multi_reduction <add>, %120, %cst_71 [1] : vector<12x32xf32> to vector<12xf32>
    %126 = vector.shape_cast %125 : vector<12xf32> to vector<12x1xf32>
    %cst_72 = arith.constant 3.200000e+01 : f32
    %127 = vector.broadcast %cst_72 : f32 to vector<12x1xf32>
    %128 = arith.divf %126, %127 : vector<12x1xf32>
    %129 = vector.broadcast %128 : vector<12x1xf32> to vector<12x32xf32>
    %130 = arith.subf %120, %129 : vector<12x32xf32>
    %131 = arith.mulf %130, %130 : vector<12x32xf32>
    %cst_73 = arith.constant dense<0.000000e+00> : vector<12xf32>
    %132 = vector.multi_reduction <add>, %131, %cst_73 [1] : vector<12x32xf32> to vector<12xf32>
    %133 = vector.shape_cast %132 : vector<12xf32> to vector<12x1xf32>
    %cst_74 = arith.constant 3.200000e+01 : f32
    %134 = vector.broadcast %cst_74 : f32 to vector<12x1xf32>
    %135 = arith.divf %133, %134 : vector<12x1xf32>
    %136 = vector.broadcast %128 : vector<12x1xf32> to vector<12x32xf32>
    %137 = arith.subf %120, %136 : vector<12x32xf32>
    %cst_75 = arith.constant 9.99999974E-6 : f32
    %138 = vector.broadcast %cst_75 : f32 to vector<12x1xf32>
    %139 = arith.addf %135, %138 : vector<12x1xf32>
    %140 = math.rsqrt %139 : vector<12x1xf32>
    %141 = vector.broadcast %140 : vector<12x1xf32> to vector<12x32xf32>
    %142 = arith.mulf %137, %141 : vector<12x32xf32>
    %143 = vector.broadcast %122 : vector<1x32xf32> to vector<12x32xf32>
    %144 = arith.mulf %142, %143 : vector<12x32xf32>
    %145 = vector.broadcast %124 : vector<1x32xf32> to vector<12x32xf32>
    %146 = arith.addf %144, %145 : vector<12x32xf32>
    %c1_76 = arith.constant 1 : index
    %c0_77 = arith.constant 0 : index
    %c0_78 = arith.constant 0 : index
    %147 = vector.load %arg10[%c1_76, %c0_77, %c0_78] : memref<2x32x384xbf16, #tpu.memory_space<vmem>>, vector<1x32x384xbf16>
    %148 = vector.shape_cast %147 : vector<1x32x384xbf16> to vector<32x384xbf16>
    %149 = arith.truncf %146 : vector<12x32xf32> to vector<12x32xbf16>
    %cst_79 = arith.constant dense<0.000000e+00> : vector<12x384xf32>
    %150 = tpu.matmul %149, %148, %cst_79 {dimension_numbers = #tpu.dot_dimension_numbers<[1], [0], [0], [1], [0, 0, 1, 1], [], []>} : vector<12x32xbf16>, vector<32x384xbf16>, vector<12x384xf32> -> vector<12x384xf32>
    %c1_80 = arith.constant 1 : index
    %c0_81 = arith.constant 0 : index
    %c0_82 = arith.constant 0 : index
    %151 = vector.load %arg11[%c1_80, %c0_81, %c0_82] : memref<2x1x384xf32, #tpu.memory_space<vmem>>, vector<1x1x384xf32>
    %152 = vector.shape_cast %151 : vector<1x1x384xf32> to vector<1x384xf32>
    %153 = vector.broadcast %152 : vector<1x384xf32> to vector<12x384xf32>
    %154 = arith.addf %150, %153 : vector<12x384xf32>
    %155 = vector.extract_strided_slice %154 {offsets = [0, 0], sizes = [12, 128], strides = [1, 1]} : vector<12x384xf32> to vector<12x128xf32>
    %156 = vector.extract_strided_slice %154 {offsets = [0, 128], sizes = [12, 128], strides = [1, 1]} : vector<12x384xf32> to vector<12x128xf32>
    %157 = vector.extract_strided_slice %154 {offsets = [0, 256], sizes = [12, 128], strides = [1, 1]} : vector<12x384xf32> to vector<12x128xf32>
    %158 = arith.truncf %0 : vector<48x12xf32> to vector<48x12xbf16>
    %159 = arith.truncf %155 : vector<12x128xf32> to vector<12x128xbf16>
    %cst_83 = arith.constant dense<0.000000e+00> : vector<48x128xf32>
    %160 = tpu.matmul %158, %159, %cst_83 {dimension_numbers = #tpu.dot_dimension_numbers<[1], [0], [0], [1], [0, 0, 1, 1], [], []>} : vector<48x12xbf16>, vector<12x128xbf16>, vector<48x128xf32> -> vector<48x128xf32>
    %161 = arith.mulf %160, %1 : vector<48x128xf32>
    %162 = arith.truncf %161 : vector<48x128xf32> to vector<48x128xbf16>
    %163 = arith.truncf %156 : vector<12x128xf32> to vector<12x128xbf16>
    %cst_84 = arith.constant dense<0.000000e+00> : vector<48x12xf32>
    %164 = tpu.matmul %162, %163, %cst_84 {dimension_numbers = #tpu.dot_dimension_numbers<[1], [1], [0], [0], [0, 0, 1, 0], [], []>} : vector<48x128xbf16>, vector<12x128xbf16>, vector<48x12xf32> -> vector<48x12xf32>
    %165 = vector.extract_strided_slice %4 {offsets = [1, 0, 0], sizes = [1, 48, 12], strides = [1, 1, 1]} : vector<2x48x12xf32> to vector<1x48x12xf32>
    %166 = vector.shape_cast %165 : vector<1x48x12xf32> to vector<48x12xf32>
    %167 = arith.addf %164, %166 : vector<48x12xf32>
    %cst_85 = arith.constant dense<0xFF800000> : vector<48xf32>
    %168 = vector.multi_reduction <maximumf>, %167, %cst_85 [1] : vector<48x12xf32> to vector<48xf32>
    %169 = vector.shape_cast %168 : vector<48xf32> to vector<48x1xf32>
    %170 = vector.broadcast %169 : vector<48x1xf32> to vector<48x12xf32>
    %171 = arith.subf %167, %170 : vector<48x12xf32>
    %172 = math.exp %171 : vector<48x12xf32>
    %cst_86 = arith.constant dense<0.000000e+00> : vector<48xf32>
    %173 = vector.multi_reduction <add>, %172, %cst_86 [1] : vector<48x12xf32> to vector<48xf32>
    %174 = vector.shape_cast %173 : vector<48xf32> to vector<48x1xf32>
    %175 = tpu.reciprocal %174 {approx = true} : vector<48x1xf32> -> vector<48x1xf32>
    %176 = vector.broadcast %175 : vector<48x1xf32> to vector<48x12xf32>
    %177 = arith.mulf %172, %176 : vector<48x12xf32>
    %178 = arith.truncf %177 : vector<48x12xf32> to vector<48x12xbf16>
    %179 = arith.truncf %157 : vector<12x128xf32> to vector<12x128xbf16>
    %cst_87 = arith.constant dense<0.000000e+00> : vector<48x128xf32>
    %180 = tpu.matmul %178, %179, %cst_87 {dimension_numbers = #tpu.dot_dimension_numbers<[1], [0], [0], [1], [0, 0, 1, 1], [], []>} : vector<48x12xbf16>, vector<12x128xbf16>, vector<48x128xf32> -> vector<48x128xf32>
    %181 = arith.mulf %180, %1 : vector<48x128xf32>
    %182 = arith.truncf %2 : vector<12x48xf32> to vector<12x48xbf16>
    %183 = arith.truncf %181 : vector<48x128xf32> to vector<48x128xbf16>
    %cst_88 = arith.constant dense<0.000000e+00> : vector<12x128xf32>
    %184 = tpu.matmul %182, %183, %cst_88 {dimension_numbers = #tpu.dot_dimension_numbers<[1], [0], [0], [1], [0, 0, 1, 1], [], []>} : vector<12x48xbf16>, vector<48x128xbf16>, vector<12x128xf32> -> vector<12x128xf32>
    %c1_89 = arith.constant 1 : index
    %c0_90 = arith.constant 0 : index
    %c0_91 = arith.constant 0 : index
    %185 = vector.load %arg12[%c1_89, %c0_90, %c0_91] : memref<2x128x32xbf16, #tpu.memory_space<vmem>>, vector<1x128x32xbf16>
    %186 = vector.shape_cast %185 : vector<1x128x32xbf16> to vector<128x32xbf16>
    %187 = arith.truncf %184 : vector<12x128xf32> to vector<12x128xbf16>
    %cst_92 = arith.constant dense<0.000000e+00> : vector<12x32xf32>
    %188 = tpu.matmul %187, %186, %cst_92 {dimension_numbers = #tpu.dot_dimension_numbers<[1], [0], [0], [1], [0, 0, 1, 1], [], []>} : vector<12x128xbf16>, vector<128x32xbf16>, vector<12x32xf32> -> vector<12x32xf32>
    %c1_93 = arith.constant 1 : index
    %c0_94 = arith.constant 0 : index
    %c0_95 = arith.constant 0 : index
    %189 = vector.load %arg13[%c1_93, %c0_94, %c0_95] : memref<2x1x32xf32, #tpu.memory_space<vmem>>, vector<1x1x32xf32>
    %190 = vector.shape_cast %189 : vector<1x1x32xf32> to vector<1x32xf32>
    %191 = vector.broadcast %190 : vector<1x32xf32> to vector<12x32xf32>
    %192 = arith.addf %188, %191 : vector<12x32xf32>
    %193 = arith.addf %192, %120 : vector<12x32xf32>
    %c1_96 = arith.constant 1 : index
    %c0_97 = arith.constant 0 : index
    %c0_98 = arith.constant 0 : index
    %194 = vector.load %arg14[%c1_96, %c0_97, %c0_98] : memref<2x1x32xf32, #tpu.memory_space<vmem>>, vector<1x1x32xf32>
    %195 = vector.shape_cast %194 : vector<1x1x32xf32> to vector<1x32xf32>
    %c1_99 = arith.constant 1 : index
    %c0_100 = arith.constant 0 : index
    %c0_101 = arith.constant 0 : index
    %196 = vector.load %arg15[%c1_99, %c0_100, %c0_101] : memref<2x1x32xf32, #tpu.memory_space<vmem>>, vector<1x1x32xf32>
    %197 = vector.shape_cast %196 : vector<1x1x32xf32> to vector<1x32xf32>
    %cst_102 = arith.constant dense<0.000000e+00> : vector<12xf32>
    %198 = vector.multi_reduction <add>, %193, %cst_102 [1] : vector<12x32xf32> to vector<12xf32>
    %199 = vector.shape_cast %198 : vector<12xf32> to vector<12x1xf32>
    %cst_103 = arith.constant 3.200000e+01 : f32
    %200 = vector.broadcast %cst_103 : f32 to vector<12x1xf32>
    %201 = arith.divf %199, %200 : vector<12x1xf32>
    %202 = vector.broadcast %201 : vector<12x1xf32> to vector<12x32xf32>
    %203 = arith.subf %193, %202 : vector<12x32xf32>
    %204 = arith.mulf %203, %203 : vector<12x32xf32>
    %cst_104 = arith.constant dense<0.000000e+00> : vector<12xf32>
    %205 = vector.multi_reduction <add>, %204, %cst_104 [1] : vector<12x32xf32> to vector<12xf32>
    %206 = vector.shape_cast %205 : vector<12xf32> to vector<12x1xf32>
    %cst_105 = arith.constant 3.200000e+01 : f32
    %207 = vector.broadcast %cst_105 : f32 to vector<12x1xf32>
    %208 = arith.divf %206, %207 : vector<12x1xf32>
    %209 = vector.broadcast %201 : vector<12x1xf32> to vector<12x32xf32>
    %210 = arith.subf %193, %209 : vector<12x32xf32>
    %cst_106 = arith.constant 9.99999974E-6 : f32
    %211 = vector.broadcast %cst_106 : f32 to vector<12x1xf32>
    %212 = arith.addf %208, %211 : vector<12x1xf32>
    %213 = math.rsqrt %212 : vector<12x1xf32>
    %214 = vector.broadcast %213 : vector<12x1xf32> to vector<12x32xf32>
    %215 = arith.mulf %210, %214 : vector<12x32xf32>
    %216 = vector.broadcast %195 : vector<1x32xf32> to vector<12x32xf32>
    %217 = arith.mulf %215, %216 : vector<12x32xf32>
    %218 = vector.broadcast %197 : vector<1x32xf32> to vector<12x32xf32>
    %219 = arith.addf %217, %218 : vector<12x32xf32>
    %c1_107 = arith.constant 1 : index
    %c0_108 = arith.constant 0 : index
    %c0_109 = arith.constant 0 : index
    %220 = vector.load %arg16[%c1_107, %c0_108, %c0_109] : memref<2x32x32xbf16, #tpu.memory_space<vmem>>, vector<1x32x32xbf16>
    %221 = vector.shape_cast %220 : vector<1x32x32xbf16> to vector<32x32xbf16>
    %222 = arith.truncf %219 : vector<12x32xf32> to vector<12x32xbf16>
    %cst_110 = arith.constant dense<0.000000e+00> : vector<12x32xf32>
    %223 = tpu.matmul %222, %221, %cst_110 {dimension_numbers = #tpu.dot_dimension_numbers<[1], [0], [0], [1], [0, 0, 1, 1], [], []>} : vector<12x32xbf16>, vector<32x32xbf16>, vector<12x32xf32> -> vector<12x32xf32>
    %c1_111 = arith.constant 1 : index
    %c0_112 = arith.constant 0 : index
    %c0_113 = arith.constant 0 : index
    %224 = vector.load %arg17[%c1_111, %c0_112, %c0_113] : memref<2x1x32xf32, #tpu.memory_space<vmem>>, vector<1x1x32xf32>
    %225 = vector.shape_cast %224 : vector<1x1x32xf32> to vector<1x32xf32>
    %226 = vector.broadcast %225 : vector<1x32xf32> to vector<12x32xf32>
    %227 = arith.addf %223, %226 : vector<12x32xf32>
    %228 = arith.addf %227, %193 : vector<12x32xf32>
    %c0_114 = arith.constant 0 : index
    %c0_115 = arith.constant 0 : index
    %229 = vector.load %arg18[%c0_114, %c0_115] : memref<32x128xbf16, #tpu.memory_space<vmem>>, vector<32x128xbf16>
    %230 = arith.truncf %228 : vector<12x32xf32> to vector<12x32xbf16>
    %cst_116 = arith.constant dense<0.000000e+00> : vector<12x128xf32>
    %231 = tpu.matmul %230, %229, %cst_116 {dimension_numbers = #tpu.dot_dimension_numbers<[1], [0], [0], [1], [0, 0, 1, 1], [], []>} : vector<12x32xbf16>, vector<32x128xbf16>, vector<12x128xf32> -> vector<12x128xf32>
    %c0_117 = arith.constant 0 : index
    %c0_118 = arith.constant 0 : index
    %232 = vector.load %arg19[%c0_117, %c0_118] : memref<1x128xf32, #tpu.memory_space<vmem>>, vector<1x128xf32>
    %233 = vector.broadcast %232 : vector<1x128xf32> to vector<12x128xf32>
    %234 = arith.addf %231, %233 : vector<12x128xf32>
    %235 = vector.shape_cast %234 : vector<12x128xf32> to vector<1x12x128xf32>
    %c0_119 = arith.constant 0 : index
    %c0_120 = arith.constant 0 : index
    %c0_121 = arith.constant 0 : index
    %236 = vector.load %arg20[%c0_119, %c0_120, %c0_121] : memref<1x12x128xf32, #tpu.memory_space<vmem>>, vector<1x12x128xf32>
    tpu.vector_store %arg20[%c0_119, %c0_120, %c0_121], %235 {strides = array<i32>} : memref<1x12x128xf32, #tpu.memory_space<vmem>>, vector<1x12x128xf32>,
    return
  }
  func.func @transform_0(%arg0: i32) -> (i32, i32, i32) {
    %c0_i32 = arith.constant 0 : i32
    %c0_i32_0 = arith.constant 0 : i32
    %c0_i32_1 = arith.constant 0 : i32
    return %arg0, %c0_i32, %c0_i32_0 : i32, i32, i32
  }
  func.func @transform_1(%arg0: i32) -> (i32, i32, i32) {
    %c0_i32 = arith.constant 0 : i32
    %c0_i32_0 = arith.constant 0 : i32
    %c0_i32_1 = arith.constant 0 : i32
    return %arg0, %c0_i32, %c0_i32_0 : i32, i32, i32
  }
  func.func @transform_2(%arg0: i32) -> (i32, i32, i32, i32) {
    %c0_i32 = arith.constant 0 : i32
    %c0_i32_0 = arith.constant 0 : i32
    %c0_i32_1 = arith.constant 0 : i32
    %c0_i32_2 = arith.constant 0 : i32
    return %arg0, %c0_i32, %c0_i32_0, %c0_i32_1 : i32, i32, i32, i32
  }
  func.func @transform_3(%arg0: i32) -> (i32, i32) {
    %c0_i32 = arith.constant 0 : i32
    %c0_i32_0 = arith.constant 0 : i32
    %c0_i32_1 = arith.constant 0 : i32
    return %c0_i32, %c0_i32_0 : i32, i32
  }
  func.func @transform_4(%arg0: i32) -> (i32, i32) {
    %c0_i32 = arith.constant 0 : i32
    %c0_i32_0 = arith.constant 0 : i32
    %c0_i32_1 = arith.constant 0 : i32
    return %c0_i32, %c0_i32_0 : i32, i32
  }
  func.func @transform_5(%arg0: i32) -> (i32, i32) {
    %c0_i32 = arith.constant 0 : i32
    %c0_i32_0 = arith.constant 0 : i32
    %c0_i32_1 = arith.constant 0 : i32
    return %c0_i32, %c0_i32_0 : i32, i32
  }
  func.func @transform_6(%arg0: i32) -> (i32, i32) {
    %c0_i32 = arith.constant 0 : i32
    %c0_i32_0 = arith.constant 0 : i32
    %c0_i32_1 = arith.constant 0 : i32
    return %c0_i32, %c0_i32_0 : i32, i32
  }
  func.func @transform_7(%arg0: i32) -> (i32, i32, i32) {
    %c0_i32 = arith.constant 0 : i32
    %c0_i32_0 = arith.constant 0 : i32
    %c0_i32_1 = arith.constant 0 : i32
    %c0_i32_2 = arith.constant 0 : i32
    return %c0_i32, %c0_i32_0, %c0_i32_1 : i32, i32, i32
  }
  func.func @transform_8(%arg0: i32) -> (i32, i32, i32) {
    %c0_i32 = arith.constant 0 : i32
    %c0_i32_0 = arith.constant 0 : i32
    %c0_i32_1 = arith.constant 0 : i32
    %c0_i32_2 = arith.constant 0 : i32
    return %c0_i32, %c0_i32_0, %c0_i32_1 : i32, i32, i32
  }
  func.func @transform_9(%arg0: i32) -> (i32, i32, i32) {
    %c0_i32 = arith.constant 0 : i32
    %c0_i32_0 = arith.constant 0 : i32
    %c0_i32_1 = arith.constant 0 : i32
    %c0_i32_2 = arith.constant 0 : i32
    return %c0_i32, %c0_i32_0, %c0_i32_1 : i32, i32, i32
  }
  func.func @transform_10(%arg0: i32) -> (i32, i32, i32) {
    %c0_i32 = arith.constant 0 : i32
    %c0_i32_0 = arith.constant 0 : i32
    %c0_i32_1 = arith.constant 0 : i32
    %c0_i32_2 = arith.constant 0 : i32
    return %c0_i32, %c0_i32_0, %c0_i32_1 : i32, i32, i32
  }
  func.func @transform_11(%arg0: i32) -> (i32, i32, i32) {
    %c0_i32 = arith.constant 0 : i32
    %c0_i32_0 = arith.constant 0 : i32
    %c0_i32_1 = arith.constant 0 : i32
    %c0_i32_2 = arith.constant 0 : i32
    return %c0_i32, %c0_i32_0, %c0_i32_1 : i32, i32, i32
  }
  func.func @transform_12(%arg0: i32) -> (i32, i32, i32) {
    %c0_i32 = arith.constant 0 : i32
    %c0_i32_0 = arith.constant 0 : i32
    %c0_i32_1 = arith.constant 0 : i32
    %c0_i32_2 = arith.constant 0 : i32
    return %c0_i32, %c0_i32_0, %c0_i32_1 : i32, i32, i32
  }
  func.func @transform_13(%arg0: i32) -> (i32, i32, i32) {
    %c0_i32 = arith.constant 0 : i32
    %c0_i32_0 = arith.constant 0 : i32
    %c0_i32_1 = arith.constant 0 : i32
    %c0_i32_2 = arith.constant 0 : i32
    return %c0_i32, %c0_i32_0, %c0_i32_1 : i32, i32, i32
  }
  func.func @transform_14(%arg0: i32) -> (i32, i32, i32) {
    %c0_i32 = arith.constant 0 : i32
    %c0_i32_0 = arith.constant 0 : i32
    %c0_i32_1 = arith.constant 0 : i32
    %c0_i32_2 = arith.constant 0 : i32
    return %c0_i32, %c0_i32_0, %c0_i32_1 : i32, i32, i32
  }
  func.func @transform_15(%arg0: i32) -> (i32, i32, i32) {
    %c0_i32 = arith.constant 0 : i32
    %c0_i32_0 = arith.constant 0 : i32
    %c0_i32_1 = arith.constant 0 : i32
    %c0_i32_2 = arith.constant 0 : i32
    return %c0_i32, %c0_i32_0, %c0_i32_1 : i32, i32, i32
  }
  func.func @transform_16(%arg0: i32) -> (i32, i32, i32) {
    %c0_i32 = arith.constant 0 : i32
    %c0_i32_0 = arith.constant 0 : i32
    %c0_i32_1 = arith.constant 0 : i32
    %c0_i32_2 = arith.constant 0 : i32
    return %c0_i32, %c0_i32_0, %c0_i32_1 : i32, i32, i32
  }
  func.func @transform_17(%arg0: i32) -> (i32, i32) {
    %c0_i32 = arith.constant 0 : i32
    %c0_i32_0 = arith.constant 0 : i32
    %c0_i32_1 = arith.constant 0 : i32
    return %c0_i32, %c0_i32_0 : i32, i32
  }
  func.func @transform_18(%arg0: i32) -> (i32, i32) {
    %c0_i32 = arith.constant 0 : i32
    %c0_i32_0 = arith.constant 0 : i32
    %c0_i32_1 = arith.constant 0 : i32
    return %c0_i32, %c0_i32_0 : i32, i32
  }
  func.func @transform_19(%arg0: i32) -> (i32, i32, i32) {
    %c0_i32 = arith.constant 0 : i32
    %c0_i32_0 = arith.constant 0 : i32
    %c0_i32_1 = arith.constant 0 : i32
    return %arg0, %c0_i32, %c0_i32_0 : i32, i32, i32
  }
}

</mosaic_0001>

<llo_original>
// kernel: forward_pallas.1
$region0: #{forward_pallas.1}
  #allocation0 [shape = 'u32[]', space=smem, size = 0x4, offset = 0x4, fixed_abs, tag = 'smem constant byte address 0x4 - core index']
  #allocation1 [shape = 'u32[144,128]{1,0:T(1,128)}', space=vmem, size = 0x12000, scoped, tag = 'internal scratch']
  %s0 = inlined_call_operand.vmem [shape: f32[4,12,8], index: 0, kind: input, shape index: {}]
  %s1 = inlined_call_operand.vmem [shape: f32[4,12,32], index: 1, kind: input, shape index: {}]
  %s2 = inlined_call_operand.vmem [shape: f32[4,2,48,12], index: 2, kind: input, shape index: {}]
  %s3 = inlined_call_operand.vmem [shape: f32[48,12], index: 3, kind: input, shape index: {}]
  %s4 = inlined_call_operand.vmem [shape: f32[48,128], index: 4, kind: input, shape index: {}]
  %s5 = inlined_call_operand.vmem [shape: f32[12,48], index: 5, kind: input, shape index: {}]
  %s6 = inlined_call_operand.vmem [shape: bf16[8,32], index: 6, kind: input, shape index: {}]
  %s7 = inlined_call_operand.vmem [shape: f32[2,1,32], index: 7, kind: input, shape index: {}, may-alias: {7,13}]
  %s8 = inlined_call_operand.vmem [shape: f32[2,1,32], index: 8, kind: input, shape index: {}, may-alias: {8,14}]
  %s9 = inlined_call_operand.vmem [shape: bf16[2,32,384], index: 9, kind: input, shape index: {}]
  %s10 = inlined_call_operand.vmem [shape: f32[2,1,384], index: 10, kind: input, shape index: {}]
  %s11 = inlined_call_operand.vmem [shape: bf16[2,128,32], index: 11, kind: input, shape index: {}]
  %s12 = inlined_call_operand.vmem [shape: f32[2,1,32], index: 12, kind: input, shape index: {}]
  %s13 = inlined_call_operand.vmem [shape: f32[2,1,32], index: 13, kind: input, shape index: {}, may-alias: {7,13}]
  %s14 = inlined_call_operand.vmem [shape: f32[2,1,32], index: 14, kind: input, shape index: {}, may-alias: {8,14}]
  %s15 = inlined_call_operand.vmem [shape: bf16[2,32,32], index: 15, kind: input, shape index: {}]
  %s16 = inlined_call_operand.vmem [shape: f32[2,1,32], index: 16, kind: input, shape index: {}]
  %s17 = inlined_call_operand.vmem [shape: bf16[32,128], index: 17, kind: input, shape index: {}]
  %s18 = inlined_call_operand.vmem [shape: f32[1,128], index: 18, kind: input, shape index: {}]
  %s19 = inlined_call_operand.vmem [shape: f32[4,12,128], index: 19, kind: output, shape index: {}]
  %s20 = sld [smem:[#allocation0]]
  $region109: #{forward_pallas.1} parent=0
    _
  %s22 = ssub.s32 1, %s20
  %s23 = scalar_select 0, %s22, %s20
  loop: start=0, step=1, limit=6
  $region2: #{forward_pallas.1} parent=0 // loop_pre_header
    _
  $region3: #{forward_pallas.1} parent=0 // loop_header
    %s25 = sphi 0, %s29
    %p26 = scmp.ge.s32.totalorder %s25, 6
    %s35 = sphi 0, %s37
    %s38 = sphi 0, %s35
    %s39 = sphi 0, %s38
    %s55 = sphi 0, %s39
    %s61 = sphi 0, %s63
    %s64 = sphi 0, %s61
    %s65 = sphi 0, %s64
    %s81 = sphi 0, %s65
    %s87 = sphi 0, %s89
    %s90 = sphi 0, %s87
    %s91 = sphi 0, %s90
    %s107 = sphi 0, %s91
    %s111 = sphi 0, %s111
    %s113 = sphi 0, %s111
    %s114 = sphi 0, %s113
    %s128 = sphi 0, %s114
    %s132 = sphi 0, %s132
    %s134 = sphi 0, %s132
    %s135 = sphi 0, %s134
    %s149 = sphi 0, %s135
    %s153 = sphi 0, %s153
    %s155 = sphi 0, %s153
    %s156 = sphi 0, %s155
    %s170 = sphi 0, %s156
    %s174 = sphi 0, %s174
    %s176 = sphi 0, %s174
    %s177 = sphi 0, %s176
    %s191 = sphi 0, %s177
    %s195 = sphi 0, %s195
    %s197 = sphi 0, %s195
    %s198 = sphi 0, %s197
    %s212 = sphi 0, %s198
    %s216 = sphi 0, %s216
    %s218 = sphi 0, %s216
    %s219 = sphi 0, %s218
    %s233 = sphi 0, %s219
    %s237 = sphi 0, %s237
    %s239 = sphi 0, %s237
    %s240 = sphi 0, %s239
    %s254 = sphi 0, %s240
    %s258 = sphi 0, %s258
    %s260 = sphi 0, %s258
    %s261 = sphi 0, %s260
    %s275 = sphi 0, %s261
    %s279 = sphi 0, %s279
    %s281 = sphi 0, %s279
    %s282 = sphi 0, %s281
    %s296 = sphi 0, %s282
    %s300 = sphi 0, %s300
    %s302 = sphi 0, %s300
    %s303 = sphi 0, %s302
    %s317 = sphi 0, %s303
    %s321 = sphi 0, %s321
    %s323 = sphi 0, %s321
    %s324 = sphi 0, %s323
    %s338 = sphi 0, %s324
    %s342 = sphi 0, %s342
    %s344 = sphi 0, %s342
    %s345 = sphi 0, %s344
    %s359 = sphi 0, %s345
    %s363 = sphi 0, %s363
    %s365 = sphi 0, %s363
    %s366 = sphi 0, %s365
    %s380 = sphi 0, %s366
    %s384 = sphi 0, %s384
    %s386 = sphi 0, %s384
    %s387 = sphi 0, %s386
    %s401 = sphi 0, %s387
    %s405 = sphi 0, %s405
    %s407 = sphi 0, %s405
    %s408 = sphi 0, %s407
    %s422 = sphi 0, %s408
    %s426 = sphi 0, %s426
    %s428 = sphi 0, %s426
    %s429 = sphi 0, %s428
    %s443 = sphi 0, %s429
    %s449 = sphi 0, %s451
    %s452 = sphi 0, %s449
    %s453 = sphi 0, %s452
    %s469 = sphi 0, %s453
  $region4: #{forward_pallas.1} parent=0 // loop_header_branch
    %28 = sbr.rel (%p26) target = $region8
  $region5: #{forward_pallas.1} parent=0 // loop_body
    %s30 = ssub.s32 %s25, 1
    %s31 = ssub.s32 %s25, 2
    %s32 = sadd.s32 %s25, 1
    %s33 = ssub.s32 %s25, %s32
    %p34 = scmp.eq.s32.totalorder %s33, 0
    %s36 = sadd.s32 %s35, 1
    %s37 = scalar_select %p34, %s35, %s36
    %p40 = pneg %p34
    %p41 = scmp.eq.s32.totalorder %s25, 3
    %p42 = por %p40, %p41
    %p43 = scmp.ne.s32.totalorder %s35, %s38
    %p44 = scmp.eq.s32.totalorder %s25, 0
    %p45 = por %p43, %p44
    %p46 = scmp.ne.s32.totalorder %s35, %s38
    %p47 = scmp.eq.s32.totalorder %s30, 3
    %p48 = por %p46, %p47
    %p49 = scmp.ne.s32.totalorder %s38, %s39
    %p50 = scmp.eq.s32.totalorder %s30, 0
    %p51 = por %p49, %p50
    %p52 = scmp.ne.s32.totalorder %s38, %s39
    %p53 = scmp.eq.s32.totalorder %s31, 3
    %p54 = por %p52, %p53
    %p56 = scmp.ne.s32.totalorder %s39, %s55
    %p57 = scmp.eq.s32.totalorder %s31, 0
    %p58 = por %p56, %p57
    %s59 = ssub.s32 %s25, %s32
    %p60 = scmp.eq.s32.totalorder %s59, 0
    %s62 = sadd.s32 %s61, 1
    %s63 = scalar_select %p60, %s61, %s62
    %p66 = pneg %p60
    %p67 = scmp.eq.s32.totalorder %s25, 3
    %p68 = por %p66, %p67
    %p69 = scmp.ne.s32.totalorder %s61, %s64
    %p70 = scmp.eq.s32.totalorder %s25, 0
    %p71 = por %p69, %p70
    %p72 = scmp.ne.s32.totalorder %s61, %s64
    %p73 = scmp.eq.s32.totalorder %s30, 3
    %p74 = por %p72, %p73
    %p75 = scmp.ne.s32.totalorder %s64, %s65
    %p76 = scmp.eq.s32.totalorder %s30, 0
    %p77 = por %p75, %p76
    %p78 = scmp.ne.s32.totalorder %s64, %s65
    %p79 = scmp.eq.s32.totalorder %s31, 3
    %p80 = por %p78, %p79
    %p82 = scmp.ne.s32.totalorder %s65, %s81
    %p83 = scmp.eq.s32.totalorder %s31, 0
    %p84 = por %p82, %p83
    %s85 = ssub.s32 %s25, %s32
    %p86 = scmp.eq.s32.totalorder %s85, 0
    %s88 = sadd.s32 %s87, 1
    %s89 = scalar_select %p86, %s87, %s88
    %p92 = pneg %p86
    %p93 = scmp.eq.s32.totalorder %s25, 3
    %p94 = por %p92, %p93
    %p95 = scmp.ne.s32.totalorder %s87, %s90
    %p96 = scmp.eq.s32.totalorder %s25, 0
    %p97 = por %p95, %p96
    %p98 = scmp.ne.s32.totalorder %s87, %s90
    %p99 = scmp.eq.s32.totalorder %s30, 3
    %p100 = por %p98, %p99
    %p101 = scmp.ne.s32.totalorder %s90, %s91
    %p102 = scmp.eq.s32.totalorder %s30, 0
    %p103 = por %p101, %p102
    %p104 = scmp.ne.s32.totalorder %s90, %s91
    %p105 = scmp.eq.s32.totalorder %s31, 3
    %p106 = por %p104, %p105
    %p108 = scmp.ne.s32.totalorder %s91, %s107
    %p109 = scmp.eq.s32.totalorder %s31, 0
    %p110 = por %p108, %p109
    %s112 = sadd.s32 %s111, 1
    %p115 = scmp.eq.s32.totalorder %s25, 3
    %p116 = scmp.ne.s32.totalorder %s111, %s113
    %p117 = scmp.eq.s32.totalorder %s25, 0
    %p118 = por %p116, %p117
    %p119 = scmp.ne.s32.totalorder %s111, %s113
    %p120 = scmp.eq.s32.totalorder %s30, 3
    %p121 = por %p119, %p120
    %p122 = scmp.ne.s32.totalorder %s113, %s114
    %p123 = scmp.eq.s32.totalorder %s30, 0
    %p124 = por %p122, %p123
    %p125 = scmp.ne.s32.totalorder %s113, %s114
    %p126 = scmp.eq.s32.totalorder %s31, 3
    %p127 = por %p125, %p126
    %p129 = scmp.ne.s32.totalorder %s114, %s128
    %p130 = scmp.eq.s32.totalorder %s31, 0
    %p131 = por %p129, %p130
    %s133 = sadd.s32 %s132, 1
    %p136 = scmp.eq.s32.totalorder %s25, 3
    %p137 = scmp.ne.s32.totalorder %s132, %s134
    %p138 = scmp.eq.s32.totalorder %s25, 0
    %p139 = por %p137, %p138
    %p140 = scmp.ne.s32.totalorder %s132, %s134
    %p141 = scmp.eq.s32.totalorder %s30, 3
    %p142 = por %p140, %p141
    %p143 = scmp.ne.s32.totalorder %s134, %s135
    %p144 = scmp.eq.s32.totalorder %s30, 0
    %p145 = por %p143, %p144
    %p146 = scmp.ne.s32.totalorder %s134, %s135
    %p147 = scmp.eq.s32.totalorder %s31, 3
    %p148 = por %p146, %p147
    %p150 = scmp.ne.s32.totalorder %s135, %s149
    %p151 = scmp.eq.s32.totalorder %s31, 0
    %p152 = por %p150, %p151
    %s154 = sadd.s32 %s153, 1
    %p157 = scmp.eq.s32.totalorder %s25, 3
    %p158 = scmp.ne.s32.totalorder %s153, %s155
    %p159 = scmp.eq.s32.totalorder %s25, 0
    %p160 = por %p158, %p159
    %p161 = scmp.ne.s32.totalorder %s153, %s155
    %p162 = scmp.eq.s32.totalorder %s30, 3
    %p163 = por %p161, %p162
    %p164 = scmp.ne.s32.totalorder %s155, %s156
    %p165 = scmp.eq.s32.totalorder %s30, 0
    %p166 = por %p164, %p165
    %p167 = scmp.ne.s32.totalorder %s155, %s156
    %p168 = scmp.eq.s32.totalorder %s31, 3
    %p169 = por %p167, %p168
    %p171 = scmp.ne.s32.totalorder %s156, %s170
    %p172 = scmp.eq.s32.totalorder %s31, 0
    %p173 = por %p171, %p172
    %s175 = sadd.s32 %s174, 1
    %p178 = scmp.eq.s32.totalorder %s25, 3
    %p179 = scmp.ne.s32.totalorder %s174, %s176
    %p180 = scmp.eq.s32.totalorder %s25, 0
    %p181 = por %p179, %p180
    %p182 = scmp.ne.s32.totalorder %s174, %s176
    %p183 = scmp.eq.s32.totalorder %s30, 3
    %p184 = por %p182, %p183
    %p185 = scmp.ne.s32.totalorder %s176, %s177
    %p186 = scmp.eq.s32.totalorder %s30, 0
    %p187 = por %p185, %p186
    %p188 = scmp.ne.s32.totalorder %s176, %s177
    %p189 = scmp.eq.s32.totalorder %s31, 3
    %p190 = por %p188, %p189
    %p192 = scmp.ne.s32.totalorder %s177, %s191
    %p193 = scmp.eq.s32.totalorder %s31, 0
    %p194 = por %p192, %p193
    %s196 = sadd.s32 %s195, 1
    %p199 = scmp.eq.s32.totalorder %s25, 3
    %p200 = scmp.ne.s32.totalorder %s195, %s197
    %p201 = scmp.eq.s32.totalorder %s25, 0
    %p202 = por %p200, %p201
    %p203 = scmp.ne.s32.totalorder %s195, %s197
    %p204 = scmp.eq.s32.totalorder %s30, 3
    %p205 = por %p203, %p204
    %p206 = scmp.ne.s32.totalorder %s197, %s198
    %p207 = scmp.eq.s32.totalorder %s30, 0
    %p208 = por %p206, %p207
    %p209 = scmp.ne.s32.totalorder %s197, %s198
    %p210 = scmp.eq.s32.totalorder %s31, 3
    %p211 = por %p209, %p210
    %p213 = scmp.ne.s32.totalorder %s198, %s212
    %p214 = scmp.eq.s32.totalorder %s31, 0
    %p215 = por %p213, %p214
    %s217 = sadd.s32 %s216, 1
    %p220 = scmp.eq.s32.totalorder %s25, 3
    %p221 = scmp.ne.s32.totalorder %s216, %s218
    %p222 = scmp.eq.s32.totalorder %s25, 0
    %p223 = por %p221, %p222
    %p224 = scmp.ne.s32.totalorder %s216, %s218
    %p225 = scmp.eq.s32.totalorder %s30, 3
    %p226 = por %p224, %p225
    %p227 = scmp.ne.s32.totalorder %s218, %s219
    %p228 = scmp.eq.s32.totalorder %s30, 0
    %p229 = por %p227, %p228
    %p230 = scmp.ne.s32.totalorder %s218, %s219
    %p231 = scmp.eq.s32.totalorder %s31, 3
    %p232 = por %p230, %p231
    %p234 = scmp.ne.s32.totalorder %s219, %s233
    %p235 = scmp.eq.s32.totalorder %s31, 0
    %p236 = por %p234, %p235
    %s238 = sadd.s32 %s237, 1
    %p241 = scmp.eq.s32.totalorder %s25, 3
    %p242 = scmp.ne.s32.totalorder %s237, %s239
    %p243 = scmp.eq.s32.totalorder %s25, 0
    %p244 = por %p242, %p243
    %p245 = scmp.ne.s32.totalorder %s237, %s239
    %p246 = scmp.eq.s32.totalorder %s30, 3
    %p247 = por %p245, %p246
    %p248 = scmp.ne.s32.totalorder %s239, %s240
    %p249 = scmp.eq.s32.totalorder %s30, 0
    %p250 = por %p248, %p249
    %p251 = scmp.ne.s32.totalorder %s239, %s240
    %p252 = scmp.eq.s32.totalorder %s31, 3
    %p253 = por %p251, %p252
    %p255 = scmp.ne.s32.totalorder %s240, %s254
    %p256 = scmp.eq.s32.totalorder %s31, 0
    %p257 = por %p255, %p256
    %s259 = sadd.s32 %s258, 1
    %p262 = scmp.eq.s32.totalorder %s25, 3
    %p263 = scmp.ne.s32.totalorder %s258, %s260
    %p264 = scmp.eq.s32.totalorder %s25, 0
    %p265 = por %p263, %p264
    %p266 = scmp.ne.s32.totalorder %s258, %s260
    %p267 = scmp.eq.s32.totalorder %s30, 3
    %p268 = por %p266, %p267
    %p269 = scmp.ne.s32.totalorder %s260, %s261
    %p270 = scmp.eq.s32.totalorder %s30, 0
    %p271 = por %p269, %p270
    %p272 = scmp.ne.s32.totalorder %s260, %s261
    %p273 = scmp.eq.s32.totalorder %s31, 3
    %p274 = por %p272, %p273
    %p276 = scmp.ne.s32.totalorder %s261, %s275
    %p277 = scmp.eq.s32.totalorder %s31, 0
    %p278 = por %p276, %p277
    %s280 = sadd.s32 %s279, 1
    %p283 = scmp.eq.s32.totalorder %s25, 3
    %p284 = scmp.ne.s32.totalorder %s279, %s281
    %p285 = scmp.eq.s32.totalorder %s25, 0
    %p286 = por %p284, %p285
    %p287 = scmp.ne.s32.totalorder %s279, %s281
    %p288 = scmp.eq.s32.totalorder %s30, 3
    %p289 = por %p287, %p288
    %p290 = scmp.ne.s32.totalorder %s281, %s282
    %p291 = scmp.eq.s32.totalorder %s30, 0
    %p292 = por %p290, %p291
    %p293 = scmp.ne.s32.totalorder %s281, %s282
    %p294 = scmp.eq.s32.totalorder %s31, 3
    %p295 = por %p293, %p294
    %p297 = scmp.ne.s32.totalorder %s282, %s296
    %p298 = scmp.eq.s32.totalorder %s31, 0
    %p299 = por %p297, %p298
    %s301 = sadd.s32 %s300, 1
    %p304 = scmp.eq.s32.totalorder %s25, 3
    %p305 = scmp.ne.s32.totalorder %s300, %s302
    %p306 = scmp.eq.s32.totalorder %s25, 0
    %p307 = por %p305, %p306
    %p308 = scmp.ne.s32.totalorder %s300, %s302
    %p309 = scmp.eq.s32.totalorder %s30, 3
    %p310 = por %p308, %p309
    %p311 = scmp.ne.s32.totalorder %s302, %s303
    %p312 = scmp.eq.s32.totalorder %s30, 0
    %p313 = por %p311, %p312
    %p314 = scmp.ne.s32.totalorder %s302, %s303
    %p315 = scmp.eq.s32.totalorder %s31, 3
    %p316 = por %p314, %p315
    %p318 = scmp.ne.s32.totalorder %s303, %s317
    %p319 = scmp.eq.s32.totalorder %s31, 0
    %p320 = por %p318, %p319
    %s322 = sadd.s32 %s321, 1
    %p325 = scmp.eq.s32.totalorder %s25, 3
    %p326 = scmp.ne.s32.totalorder %s321, %s323
    %p327 = scmp.eq.s32.totalorder %s25, 0
    %p328 = por %p326, %p327
    %p329 = scmp.ne.s32.totalorder %s321, %s323
    %p330 = scmp.eq.s32.totalorder %s30, 3
    %p331 = por %p329, %p330
    %p332 = scmp.ne.s32.totalorder %s323, %s324
    %p333 = scmp.eq.s32.totalorder %s30, 0
    %p334 = por %p332, %p333
    %p335 = scmp.ne.s32.totalorder %s323, %s324
    %p336 = scmp.eq.s32.totalorder %s31, 3
    %p337 = por %p335, %p336
    %p339 = scmp.ne.s32.totalorder %s324, %s338
    %p340 = scmp.eq.s32.totalorder %s31, 0
    %p341 = por %p339, %p340
    %s343 = sadd.s32 %s342, 1
    %p346 = scmp.eq.s32.totalorder %s25, 3
    %p347 = scmp.ne.s32.totalorder %s342, %s344
    %p348 = scmp.eq.s32.totalorder %s25, 0
    %p349 = por %p347, %p348
    %p350 = scmp.ne.s32.totalorder %s342, %s344
    %p351 = scmp.eq.s32.totalorder %s30, 3
    %p352 = por %p350, %p351
    %p353 = scmp.ne.s32.totalorder %s344, %s345
    %p354 = scmp.eq.s32.totalorder %s30, 0
    %p355 = por %p353, %p354
    %p356 = scmp.ne.s32.totalorder %s344, %s345
    %p357 = scmp.eq.s32.totalorder %s31, 3
    %p358 = por %p356, %p357
    %p360 = scmp.ne.s32.totalorder %s345, %s359
    %p361 = scmp.eq.s32.totalorder %s31, 0
    %p362 = por %p360, %p361
    %s364 = sadd.s32 %s363, 1
    %p367 = scmp.eq.s32.totalorder %s25, 3
    %p368 = scmp.ne.s32.totalorder %s363, %s365
    %p369 = scmp.eq.s32.totalorder %s25, 0
    %p370 = por %p368, %p369
    %p371 = scmp.ne.s32.totalorder %s363, %s365
    %p372 = scmp.eq.s32.totalorder %s30, 3
    %p373 = por %p371, %p372
    %p374 = scmp.ne.s32.totalorder %s365, %s366
    %p375 = scmp.eq.s32.totalorder %s30, 0
    %p376 = por %p374, %p375
    %p377 = scmp.ne.s32.totalorder %s365, %s366
    %p378 = scmp.eq.s32.totalorder %s31, 3
    %p379 = por %p377, %p378
    %p381 = scmp.ne.s32.totalorder %s366, %s380
    %p382 = scmp.eq.s32.totalorder %s31, 0
    %p383 = por %p381, %p382
    %s385 = sadd.s32 %s384, 1
    %p388 = scmp.eq.s32.totalorder %s25, 3
    %p389 = scmp.ne.s32.totalorder %s384, %s386
    %p390 = scmp.eq.s32.totalorder %s25, 0
    %p391 = por %p389, %p390
    %p392 = scmp.ne.s32.totalorder %s384, %s386
    %p393 = scmp.eq.s32.totalorder %s30, 3
    %p394 = por %p392, %p393
    %p395 = scmp.ne.s32.totalorder %s386, %s387
    %p396 = scmp.eq.s32.totalorder %s30, 0
    %p397 = por %p395, %p396
    %p398 = scmp.ne.s32.totalorder %s386, %s387
    %p399 = scmp.eq.s32.totalorder %s31, 3
    %p400 = por %p398, %p399
    %p402 = scmp.ne.s32.totalorder %s387, %s401
    %p403 = scmp.eq.s32.totalorder %s31, 0
    %p404 = por %p402, %p403
    %s406 = sadd.s32 %s405, 1
    %p409 = scmp.eq.s32.totalorder %s25, 3
    %p410 = scmp.ne.s32.totalorder %s405, %s407
    %p411 = scmp.eq.s32.totalorder %s25, 0
    %p412 = por %p410, %p411
    %p413 = scmp.ne.s32.totalorder %s405, %s407
    %p414 = scmp.eq.s32.totalorder %s30, 3
    %p415 = por %p413, %p414
    %p416 = scmp.ne.s32.totalorder %s407, %s408
    %p417 = scmp.eq.s32.totalorder %s30, 0
    %p418 = por %p416, %p417
    %p419 = scmp.ne.s32.totalorder %s407, %s408
    %p420 = scmp.eq.s32.totalorder %s31, 3
    %p421 = por %p419, %p420
    %p423 = scmp.ne.s32.totalorder %s408, %s422
    %p424 = scmp.eq.s32.totalorder %s31, 0
    %p425 = por %p423, %p424
    %s427 = sadd.s32 %s426, 1
    %p430 = scmp.eq.s32.totalorder %s25, 3
    %p431 = scmp.ne.s32.totalorder %s426, %s428
    %p432 = scmp.eq.s32.totalorder %s25, 0
    %p433 = por %p431, %p432
    %p434 = scmp.ne.s32.totalorder %s426, %s428
    %p435 = scmp.eq.s32.totalorder %s30, 3
    %p436 = por %p434, %p435
    %p437 = scmp.ne.s32.totalorder %s428, %s429
    %p438 = scmp.eq.s32.totalorder %s30, 0
    %p439 = por %p437, %p438
    %p440 = scmp.ne.s32.totalorder %s428, %s429
    %p441 = scmp.eq.s32.totalorder %s31, 3
    %p442 = por %p440, %p441
    %p444 = scmp.ne.s32.totalorder %s429, %s443
    %p445 = scmp.eq.s32.totalorder %s31, 0
    %p446 = por %p444, %p445
    %s447 = ssub.s32 %s25, %s32
    %p448 = scmp.eq.s32.totalorder %s447, 0
    %s450 = sadd.s32 %s449, 1
    %s451 = scalar_select %p448, %s449, %s450
    %p454 = pneg %p448
    %p455 = scmp.eq.s32.totalorder %s25, 3
    %p456 = por %p454, %p455
    %p457 = scmp.ne.s32.totalorder %s449, %s452
    %p458 = scmp.eq.s32.totalorder %s25, 0
    %p459 = por %p457, %p458
    %p460 = scmp.ne.s32.totalorder %s449, %s452
    %p461 = scmp.eq.s32.totalorder %s30, 3
    %p462 = por %p460, %p461
    %p463 = scmp.ne.s32.totalorder %s452, %s453
    %p464 = scmp.eq.s32.totalorder %s30, 0
    %p465 = por %p463, %p464
    %p466 = scmp.ne.s32.totalorder %s452, %s453
    %p467 = scmp.eq.s32.totalorder %s31, 3
    %p468 = por %p466, %p467
    %p470 = scmp.ne.s32.totalorder %s453, %s469
    %p471 = scmp.eq.s32.totalorder %s31, 0
    %p472 = por %p470, %p471
    %p473 = scmp.le.s32.totalorder 1, %s25
    %p474 = scmp.lt.s32.totalorder %s25, 5
    %p475 = pnand %p473, %p474
    %p476 = pneg %p475
    // Predicated region
    $region9: #{forward_pallas.1} parent=5 // pred_check
      _
    $region10: #{forward_pallas.1} parent=5 // pred_check_branch
      %478 = sbr.rel (%p475) target = $region12
    $region11: #{forward_pallas.1} parent=5 // pred_region
      %s479 = ssub.s32 %s25, 1
      // Predicated region
      $region13: #{forward_pallas.1} parent=11 // pred_check
        %p480 = pneg %p124
      $region14: #{forward_pallas.1} parent=11 // pred_check_branch
        %482 = sbr.rel (%p480) target = $region16
      $region15: #{forward_pallas.1} parent=11 // pred_region
        _
      $region16: #{forward_pallas.1} parent=11 // pred_fallthru
        _
      // Predicated region
      $region17: #{forward_pallas.1} parent=11 // pred_check
        %p483 = pneg %p145
      $region18: #{forward_pallas.1} parent=11 // pred_check_branch
        %485 = sbr.rel (%p483) target = $region20
      $region19: #{forward_pallas.1} parent=11 // pred_region
        _
      $region20: #{forward_pallas.1} parent=11 // pred_fallthru
        _
      // Predicated region
      $region21: #{forward_pallas.1} parent=11 // pred_check
        %p486 = pneg %p166
      $region22: #{forward_pallas.1} parent=11 // pred_check_branch
        %488 = sbr.rel (%p486) target = $region24
      $region23: #{forward_pallas.1} parent=11 // pred_region
        _
      $region24: #{forward_pallas.1} parent=11 // pred_fallthru
        _
      // Predicated region
      $region25: #{forward_pallas.1} parent=11 // pred_check
        %p489 = pneg %p187
      $region26: #{forward_pallas.1} parent=11 // pred_check_branch
        %491 = sbr.rel (%p489) target = $region28
      $region27: #{forward_pallas.1} parent=11 // pred_region
        _
      $region28: #{forward_pallas.1} parent=11 // pred_fallthru
        _
      // Predicated region
      $region29: #{forward_pallas.1} parent=11 // pred_check
        %p492 = pneg %p208
      $region30: #{forward_pallas.1} parent=11 // pred_check_branch
        %494 = sbr.rel (%p492) target = $region32
      $region31: #{forward_pallas.1} parent=11 // pred_region
        _
      $region32: #{forward_pallas.1} parent=11 // pred_fallthru
        _
      // Predicated region
      $region33: #{forward_pallas.1} parent=11 // pred_check
        %p495 = pneg %p229
      $region34: #{forward_pallas.1} parent=11 // pred_check_branch
        %497 = sbr.rel (%p495) target = $region36
      $region35: #{forward_pallas.1} parent=11 // pred_region
        _
      $region36: #{forward_pallas.1} parent=11 // pred_fallthru
        _
      // Predicated region
      $region37: #{forward_pallas.1} parent=11 // pred_check
        %p498 = pneg %p250
      $region38: #{forward_pallas.1} parent=11 // pred_check_branch
        %500 = sbr.rel (%p498) target = $region40
      $region39: #{forward_pallas.1} parent=11 // pred_region
        _
      $region40: #{forward_pallas.1} parent=11 // pred_fallthru
        _
      // Predicated region
      $region41: #{forward_pallas.1} parent=11 // pred_check
        %p501 = pneg %p271
      $region42: #{forward_pallas.1} parent=11 // pred_check_branch
        %503 = sbr.rel (%p501) target = $region44
      $region43: #{forward_pallas.1} parent=11 // pred_region
        _
      $region44: #{forward_pallas.1} parent=11 // pred_fallthru
        _
      // Predicated region
      $region45: #{forward_pallas.1} parent=11 // pred_check
        %p504 = pneg %p292
      $region46: #{forward_pallas.1} parent=11 // pred_check_branch
        %506 = sbr.rel (%p504) target = $region48
      $region47: #{forward_pallas.1} parent=11 // pred_region
        _
      $region48: #{forward_pallas.1} parent=11 // pred_fallthru
        _
      // Predicated region
      $region49: #{forward_pallas.1} parent=11 // pred_check
        %p507 = pneg %p313
      $region50: #{forward_pallas.1} parent=11 // pred_check_branch
        %509 = sbr.rel (%p507) target = $region52
      $region51: #{forward_pallas.1} parent=11 // pred_region
        _
      $region52: #{forward_pallas.1} parent=11 // pred_fallthru
        _
      // Predicated region
      $region53: #{forward_pallas.1} parent=11 // pred_check
        %p510 = pneg %p334
      $region54: #{forward_pallas.1} parent=11 // pred_check_branch
        %512 = sbr.rel (%p510) target = $region56
      $region55: #{forward_pallas.1} parent=11 // pred_region
        _
      $region56: #{forward_pallas.1} parent=11 // pred_fallthru
        _
      // Predicated region
      $region57: #{forward_pallas.1} parent=11 // pred_check
        %p513 = pneg %p355
      $region58: #{forward_pallas.1} parent=11 // pred_check_branch
        %515 = sbr.rel (%p513) target = $region60
      $region59: #{forward_pallas.1} parent=11 // pred_region
        _
      $region60: #{forward_pallas.1} parent=11 // pred_fallthru
        _
      // Predicated region
      $region61: #{forward_pallas.1} parent=11 // pred_check
        %p516 = pneg %p376
      $region62: #{forward_pallas.1} parent=11 // pred_check_branch
        %518 = sbr.rel (%p516) target = $region64
      $region63: #{forward_pallas.1} parent=11 // pred_region
        _
      $region64: #{forward_pallas.1} parent=11 // pred_fallthru
        _
      // Predicated region
      $region65: #{forward_pallas.1} parent=11 // pred_check
        %p519 = pneg %p397
      $region66: #{forward_pallas.1} parent=11 // pred_check_branch
        %521 = sbr.rel (%p519) target = $region68
      $region67: #{forward_pallas.1} parent=11 // pred_region
        _
      $region68: #{forward_pallas.1} parent=11 // pred_fallthru
        _
      // Predicated region
      $region69: #{forward_pallas.1} parent=11 // pred_check
        %p522 = pneg %p418
      $region70: #{forward_pallas.1} parent=11 // pred_check_branch
        %524 = sbr.rel (%p522) target = $region72
      $region71: #{forward_pallas.1} parent=11 // pred_region
        _
      $region72: #{forward_pallas.1} parent=11 // pred_fallthru
        _
      // Predicated region
      $region73: #{forward_pallas.1} parent=11 // pred_check
        %p525 = pneg %p439
      $region74: #{forward_pallas.1} parent=11 // pred_check_branch
        %527 = sbr.rel (%p525) target = $region76
      $region75: #{forward_pallas.1} parent=11 // pred_region
        _
      $region76: #{forward_pallas.1} parent=11 // pred_fallthru
        _
    $region12: #{forward_pallas.1} parent=5 // pred_fallthru
      _
    %p528 = scmp.lt.s32.totalorder %s25, 4
    // Predicated region
    $region77: #{forward_pallas.1} parent=5 // pred_check
      %p529 = pneg %p528
    $region78: #{forward_pallas.1} parent=5 // pred_check_branch
      %531 = sbr.rel (%p529) target = $region80
    $region79: #{forward_pallas.1} parent=5 // pred_region
      // Predicated region
      $region81: #{forward_pallas.1} parent=79 // pred_check
        %p532 = pneg %p45
      $region82: #{forward_pallas.1} parent=79 // pred_check_branch
        %534 = sbr.rel (%p532) target = $region84
      $region83: #{forward_pallas.1} parent=79 // pred_region
        %p535 = scmp.lt.s32.totalorder %s25, 3
        %s536 = scalar_select %p535, %s25, 3
        %s537 = smul.addr %s536, 2
        %s538 = smul.addr %s537, 8
        %s539 = scalar_lea.vmem %s0, %s538
      $region84: #{forward_pallas.1} parent=79 // pred_fallthru
        _
      // Predicated region
      $region85: #{forward_pallas.1} parent=79 // pred_check
        %p540 = pneg %p71
      $region86: #{forward_pallas.1} parent=79 // pred_check_branch
        %542 = sbr.rel (%p540) target = $region88
      $region87: #{forward_pallas.1} parent=79 // pred_region
        %p543 = scmp.lt.s32.totalorder %s25, 3
        %s544 = scalar_select %p543, %s25, 3
        %s545 = smul.addr %s544, 2
        %s546 = smul.addr %s545, 8
        %s547 = scalar_lea.vmem %s1, %s546
      $region88: #{forward_pallas.1} parent=79 // pred_fallthru
        _
      // Predicated region
      $region89: #{forward_pallas.1} parent=79 // pred_check
        %p548 = pneg %p97
      $region90: #{forward_pallas.1} parent=79 // pred_check_branch
        %550 = sbr.rel (%p548) target = $region92
      $region91: #{forward_pallas.1} parent=79 // pred_region
        %p551 = scmp.lt.s32.totalorder %s25, 3
        %s552 = scalar_select %p551, %s25, 3
        %s553 = smul.addr %s552, 12
        %s554 = smul.addr %s553, 8
        %s555 = scalar_lea.vmem %s2, %s554
      $region92: #{forward_pallas.1} parent=79 // pred_fallthru
        _
    $region80: #{forward_pallas.1} parent=5 // pred_fallthru
      _
    %p556 = scmp.le.s32.totalorder 1, %s25
    %p557 = scmp.lt.s32.totalorder %s25, 5
    %p558 = pnand %p556, %p557
    %p559 = pneg %p558
    // Predicated region
    $region93: #{forward_pallas.1} parent=5 // pred_check
      _
    $region94: #{forward_pallas.1} parent=5 // pred_check_branch
      %561 = sbr.rel (%p558) target = $region96
    $region95: #{forward_pallas.1} parent=5 // pred_region
      %s562 = ssub.s32 %s25, 1
      %p563 = scmp.lt.s32.totalorder %s30, 3
      %s564 = scalar_select %p563, %s30, 3
      %s565 = smul.addr %s564, 2
      %s566 = smul.addr %s565, 8
      %s567 = scalar_lea.vmem %s0, %s566
      %p568 = pneg %p51
      %p569 = pneg %p48
      %p570 = scmp.lt.s32.totalorder %s30, 3
      %s571 = scalar_select %p570, %s30, 3
      %s572 = smul.addr %s571, 2
      %s573 = smul.addr %s572, 8
      %s574 = scalar_lea.vmem %s1, %s573
      %p575 = pneg %p77
      %p576 = pneg %p74
      %p577 = scmp.lt.s32.totalorder %s30, 3
      %s578 = scalar_select %p577, %s30, 3
      %s579 = smul.addr %s578, 12
      %s580 = smul.addr %s579, 8
      %s581 = scalar_lea.vmem %s2, %s580
      %p582 = pneg %p103
      %p583 = pneg %p100
      %p584 = pneg %p124
      %p585 = pneg %p121
      %p586 = pneg %p145
      %p587 = pneg %p142
      %p588 = pneg %p166
      %p589 = pneg %p163
      %p590 = pneg %p187
      %p591 = pneg %p184
      %p592 = pneg %p208
      %p593 = pneg %p205
      %p594 = pneg %p229
      %p595 = pneg %p226
      %p596 = pneg %p250
      %p597 = pneg %p247
      %p598 = pneg %p271
      %p599 = pneg %p268
      %p600 = pneg %p292
      %p601 = pneg %p289
      %p602 = pneg %p313
      %p603 = pneg %p310
      %p604 = pneg %p334
      %p605 = pneg %p331
      %p606 = pneg %p355
      %p607 = pneg %p352
      %p608 = pneg %p376
      %p609 = pneg %p373
      %p610 = pneg %p397
      %p611 = pneg %p394
      %p612 = pneg %p418
      %p613 = pneg %p415
      %p614 = pneg %p439
      %p615 = pneg %p436
      %p616 = pneg %p465
      %p617 = pneg %p462
      %p618 = scmp.lt.s32.totalorder %s30, 3
      %s619 = scalar_select %p618, %s30, 3
      %s620 = smul.addr %s619, 2
      %s621 = smul.addr %s620, 8
      %s622 = scalar_lea.vmem %s19, %s621
      %p623 = scmp.lt.s32.totalorder %s30, 3
      %s624 = scalar_select %p623, %s30, 3
      %s625 = smul.addr %s624, 2
      %s626 = smul.addr %s625, 8
      %s627 = scalar_lea.vmem %s0, %s626
      %p628 = scmp.lt.s32.totalorder %s30, 3
      %s629 = scalar_select %p628, %s30, 3
      %s630 = smul.addr %s629, 2
      %s631 = smul.addr %s630, 8
      %s632 = scalar_lea.vmem %s1, %s631
      %p633 = scmp.lt.s32.totalorder %s30, 3
      %s634 = scalar_select %p633, %s30, 3
      %s635 = smul.addr %s634, 12
      %s636 = smul.addr %s635, 8
      %s637 = scalar_lea.vmem %s2, %s636
      %p638 = scmp.lt.s32.totalorder %s30, 3
      %s639 = scalar_select %p638, %s30, 3
      %s640 = smul.addr %s639, 2
      %s641 = smul.addr %s640, 8
      %s642 = scalar_lea.vmem %s19, %s641
      %v644 = vld [vmem:[%s3] sm:$0xff]
      %v645 = vld [vmem:[%s3 + $0x8] sm:$0xff]
      %v646 = vld [vmem:[%s3 + $0x10] sm:$0xff]
      %v647 = vld [vmem:[%s3 + $0x18] sm:$0xff]
      %v648 = vld [vmem:[%s3 + $0x20] sm:$0xff]
      %v649 = vld [vmem:[%s3 + $0x28] sm:$0xff]
      %v650 = vld [vmem:[%s4] sm:$0xff]
      %v651 = vld [vmem:[%s4 + $0x8] sm:$0xff]
      %v652 = vld [vmem:[%s4 + $0x10] sm:$0xff]
      %v653 = vld [vmem:[%s4 + $0x18] sm:$0xff]
      %v654 = vld [vmem:[%s4 + $0x20] sm:$0xff]
      %v655 = vld [vmem:[%s4 + $0x28] sm:$0xff]
      %v656 = vld [vmem:[%s5] sm:$0xff]
      %v657 = vld [vmem:[%s5 + $0x8] sm:$0xf]
      %v658 = vld [vmem:[%s637] sm:$0xff]
      %v659 = vld [vmem:[%s637 + $0x8] sm:$0xff]
      %v660 = vld [vmem:[%s637 + $0x10] sm:$0xff]
      %v661 = vld [vmem:[%s637 + $0x18] sm:$0xff]
      %v662 = vld [vmem:[%s637 + $0x20] sm:$0xff]
      %v663 = vld [vmem:[%s637 + $0x28] sm:$0xff]
      %v664 = vld [vmem:[%s637 + $0x30] sm:$0xff]
      %v665 = vld [vmem:[%s637 + $0x38] sm:$0xff]
      %v666 = vld [vmem:[%s637 + $0x40] sm:$0xff]
      %v667 = vld [vmem:[%s637 + $0x48] sm:$0xff]
      %v668 = vld [vmem:[%s637 + $0x50] sm:$0xff]
      %v669 = vld [vmem:[%s637 + $0x58] sm:$0xff]
      %v670 = vld [vmem:[%s627] sm:$0xff]
      %v671 = vld [vmem:[%s627 + $0x8] sm:$0xf]
      %v672 = vld [vmem:[%s6] sm:$0xf]
      %v673 = vpack.c.bf16 %v671, %v670
      %v674 = vld [vmem:[%s632] sm:$0xff]
      %v675 = vld [vmem:[%s632 + $0x8] sm:$0xf]
      %vm676 = vcmask 64512
      %v678 = vsel %vm676, %v673, 0
      %vm680 = vcmask 1043456
      %v682 = vsel %vm680, %v672, 0
      %684 = vmatprep.subr.bf16.mxu0 0
      %685 = vmatpush1.bf16.msra.mxu0 %v682
      %686 = vmatprep.subr.bf16.mxu0 0
      %687 = vmatpush1.bf16.msra.mxu0 0
      %688 = vmatprep.subr.bf16.mxu0 0
      %689 = vmatpush1.bf16.msra.mxu0 0
      %690 = vmatprep.subr.bf16.mxu0 0
      %691 = vmatpush1.bf16.msra.mxu0 0
      %692 = vmatprep.subr.bf16.mxu0 0
      %693 = vmatpush1.bf16.msra.mxu0 0
      %694 = vmatprep.subr.bf16.mxu0 0
      %695 = vmatpush1.bf16.msra.mxu0 0
      %696 = vmatprep.subr.bf16.mxu0 0
      %697 = vmatpush1.bf16.msra.mxu0 0
      %698 = vmatprep.subr.bf16.mxu0 0
      %699 = vmatpush1.bf16.msra.mxu0 0
      %700 = vmatprep.subr.bf16.mxu0 0
      %701 = vmatpush1.bf16.msra.mxu0 0
      %702 = vmatprep.subr.bf16.mxu0 0
      %703 = vmatpush1.bf16.msra.mxu0 0
      %704 = vmatprep.subr.bf16.mxu0 0
      %705 = vmatpush1.bf16.msra.mxu0 0
      %706 = vmatprep.subr.bf16.mxu0 0
      %707 = vmatpush1.bf16.msra.mxu0 0
      %708 = vmatprep.subr.bf16.mxu0 0
      %709 = vmatpush1.bf16.msra.mxu0 0
      %710 = vmatprep.subr.bf16.mxu0 0
      %711 = vmatpush1.bf16.msra.mxu0 0
      %712 = vmatprep.subr.bf16.mxu0 0
      %713 = vmatpush1.bf16.msra.mxu0 0
      %714 = vmatprep.subr.bf16.mxu0 0
      %715 = vmatpush1.bf16.msra.mxu0 0
      %716 = vmatprep.mubr.bf16.mxu0 0
      %717 = vmatmul.mubr.bf16.gmra.mrb[0].mxu0 %v678
      %v718 = vpop.f32.mrb[0].mxu0
      %v719 = vadd.f32 %v674, %v718
      %v720 = vpop.f32.mrb[0].mxu0
      %v721 = vpop.f32.mrb[0].mxu0
      %v722 = vadd.f32 %v675, %v721
      %v723 = vpop.f32.mrb[0].mxu0
      %724 = vdwg.mxu0
      %v725 = vld [vmem:[%s7] sm:$0x1]
      %v726 = vld [vmem:[%s8] sm:$0x1]
      %vm727 = vcmask 261120
      %v728 = vsel %vm727, %v719, 0.0
      %729 = vadd.xlane.f32.xlu0 %v728
      %v730 = vpop.xlane.xlu0 %729
      %vm731 = vcmask 257024
      %v732 = vsel %vm731, %v722, 0.0
      %733 = vadd.xlane.f32.xlu0 %v732
      %v734 = vpop.xlane.xlu0 %733
      %v735 = vrcp.pop 32.0
      %v736 = vmul.f32 %v730, %v735
      %v737 = vmul.f32 %v734, %v735
      %v738 = vsub.f32 %v719, %v736
      %v739 = vsub.f32 %v722, %v737
      %v740 = vmul.f32 %v738, %v738
      %v741 = vmul.f32 %v739, %v739
      %v742 = vsel %vm727, %v740, 0.0
      %743 = vadd.xlane.f32.xlu0 %v742
      %v744 = vpop.xlane.xlu0 %743
      %v745 = vsel %vm731, %v741, 0.0
      %746 = vadd.xlane.f32.xlu0 %v745
      %v747 = vpop.xlane.xlu0 %746
      %v748 = vmul.f32 %v744, %v735
      %v749 = vmul.f32 %v747, %v735
      %v750 = vadd.f32 %v748, 1e-05
      %v751 = vadd.f32 %v749, 1e-05
      %v752 = vrsqrt.pop %v750
      %v753 = vrsqrt.pop %v751
      %v754 = vmul.f32 %v738, %v752
      %v755 = vmul.f32 %v739, %v753
      %v757 = vlaneseq
      %v758 = vshrl.u32 %v757, 7
      %v759 = vsub.s32 0, %v758
      %v760 = vrot.slane %v725, %v759
      %v762 = vmul.f32 %v754, %v760
      %v763 = vmul.f32 %v755, %v760
      %v765 = vlaneseq
      %v766 = vshrl.u32 %v765, 7
      %v767 = vsub.s32 0, %v766
      %v768 = vrot.slane %v726, %v767
      %v770 = vadd.f32 %v762, %v768
      %v771 = vadd.f32 %v763, %v768
      %v772 = vld [vmem:[%s9] sm:$0xff]
      %v773 = vld [vmem:[%s9 + $0x8] sm:$0xf]
      %v774 = vld [vmem:[%s9 + $0xc] sm:$0xff]
      %v775 = vld [vmem:[%s9 + $0x14] sm:$0xf]
      %v776 = vld [vmem:[%s9 + $0x18] sm:$0xff]
      %v777 = vld [vmem:[%s9 + $0x20] sm:$0xf]
      %v778 = vld [vmem:[%s9 + $0x24] sm:$0xff]
      %v779 = vld [vmem:[%s9 + $0x2c] sm:$0xf]
      %v780 = vpack.c.bf16 %v771, %v770
      %v781 = vld [vmem:[%s10] sm:$0x7]
      %v783 = vlaneseq
      %v784 = vshrl.u32 %v783, 7
      %v785 = vsub.s32 0, %v784
      %v786 = vrot.slane %v781, %v785
      %v787 = vlaneseq
      %v788 = vshrl.u32 %v787, 7
      %v789 = vsub.s32 1, %v788
      %v790 = vrot.slane %v781, %v789
      %v791 = vlaneseq
      %v792 = vshrl.u32 %v791, 7
      %v793 = vsub.s32 2, %v792
      %v794 = vrot.slane %v781, %v793
      %v806 = vunpack.c.l.b16 %v772
      %v807 = vunpack.c.h.b16 %v772
      %v808 = vunpack.c.l.b16 %v773
      %v809 = vunpack.c.l.b16 %v774
      %v810 = vunpack.c.h.b16 %v774
      %v811 = vunpack.c.l.b16 %v775
      %v812 = vunpack.c.l.b16 %v776
      %v813 = vunpack.c.h.b16 %v776
      %v814 = vunpack.c.l.b16 %v777
      %v815 = vunpack.c.l.b16 %v778
      %v816 = vunpack.c.h.b16 %v778
      %v817 = vunpack.c.l.b16 %v779
      %v818 = vpack.c.b16 %v809, %v806
      %v819 = vpack.c.b16 %v810, %v807
      %v820 = vpack.c.b16 %v811, %v808
      %v821 = vpack.c.b16 %v815, %v812
      %v822 = vpack.c.b16 %v816, %v813
      %v823 = vpack.c.b16 %v817, %v814
      %v831 = vsel %vm727, %v780, 0
      %833 = vmatprep.subr.bf16.mxu0 %v819
      %834 = vmatpush1.bf16.msra.mxu0 %v818
      %835 = vmatprep.subr.bf16.mxu0 %v822
      %836 = vmatpush1.bf16.msra.mxu0 %v821
      %837 = vmatprep.subr.bf16.mxu0 0
      %838 = vmatpush1.bf16.msra.mxu0 0
      %839 = vmatprep.subr.bf16.mxu0 0
      %840 = vmatpush1.bf16.msra.mxu0 0
      %841 = vmatprep.subr.bf16.mxu0 0
      %842 = vmatpush1.bf16.msra.mxu0 0
      %843 = vmatprep.subr.bf16.mxu0 0
      %844 = vmatpush1.bf16.msra.mxu0 0
      %845 = vmatprep.subr.bf16.mxu0 0
      %846 = vmatpush1.bf16.msra.mxu0 0
      %847 = vmatprep.subr.bf16.mxu0 0
      %848 = vmatpush1.bf16.msra.mxu0 0
      %849 = vmatprep.subr.bf16.mxu0 0
      %850 = vmatpush1.bf16.msra.mxu0 0
      %851 = vmatprep.subr.bf16.mxu0 0
      %852 = vmatpush1.bf16.msra.mxu0 0
      %853 = vmatprep.subr.bf16.mxu0 0
      %854 = vmatpush1.bf16.msra.mxu0 0
      %855 = vmatprep.subr.bf16.mxu0 0
      %856 = vmatpush1.bf16.msra.mxu0 0
      %857 = vmatprep.subr.bf16.mxu0 0
      %858 = vmatpush1.bf16.msra.mxu0 0
      %859 = vmatprep.subr.bf16.mxu0 0
      %860 = vmatpush1.bf16.msra.mxu0 0
      %861 = vmatprep.subr.bf16.mxu0 0
      %862 = vmatpush1.bf16.msra.mxu0 0
      %863 = vmatprep.subr.bf16.mxu0 0
      %864 = vmatpush1.bf16.msra.mxu0 0
      %865 = vmatprep.mubr.bf16.mxu0 0
      %866 = vmatmul.mubr.bf16.gmra.mrb[0].mxu0 %v831
      %v867 = vpop.f32.mrb[0].mxu0
      %v868 = vadd.f32 %v786, %v867
      %v869 = vpop.f32.mrb[0].mxu0
      %v870 = vadd.f32 %v790, %v869
      %v871 = vpop.f32.mrb[0].mxu0
      %v872 = vadd.f32 %v786, %v871
      %v873 = vpop.f32.mrb[0].mxu0
      %v874 = vadd.f32 %v790, %v873
      %875 = vdwg.mxu0
      %876 = vmatprep.subr.bf16.mxu0 0
      %877 = vmatpush1.bf16.msra.mxu0 %v820
      %878 = vmatprep.subr.bf16.mxu0 0
      %879 = vmatpush1.bf16.msra.mxu0 %v823
      %880 = vmatprep.subr.bf16.mxu0 0
      %881 = vmatpush1.bf16.msra.mxu0 0
      %882 = vmatprep.subr.bf16.mxu0 0
      %883 = vmatpush1.bf16.msra.mxu0 0
      %884 = vmatprep.subr.bf16.mxu0 0
      %885 = vmatpush1.bf16.msra.mxu0 0
      %886 = vmatprep.subr.bf16.mxu0 0
      %887 = vmatpush1.bf16.msra.mxu0 0
      %888 = vmatprep.subr.bf16.mxu0 0
      %889 = vmatpush1.bf16.msra.mxu0 0
      %890 = vmatprep.subr.bf16.mxu0 0
      %891 = vmatpush1.bf16.msra.mxu0 0
      %892 = vmatprep.subr.bf16.mxu0 0
      %893 = vmatpush1.bf16.msra.mxu0 0
      %894 = vmatprep.subr.bf16.mxu0 0
      %895 = vmatpush1.bf16.msra.mxu0 0
      %896 = vmatprep.subr.bf16.mxu0 0
      %897 = vmatpush1.bf16.msra.mxu0 0
      %898 = vmatprep.subr.bf16.mxu0 0
      %899 = vmatpush1.bf16.msra.mxu0 0
      %900 = vmatprep.subr.bf16.mxu0 0
      %901 = vmatpush1.bf16.msra.mxu0 0
      %902 = vmatprep.subr.bf16.mxu0 0
      %903 = vmatpush1.bf16.msra.mxu0 0
      %904 = vmatprep.subr.bf16.mxu0 0
      %905 = vmatpush1.bf16.msra.mxu0 0
      %906 = vmatprep.subr.bf16.mxu0 0
      %907 = vmatpush1.bf16.msra.mxu0 0
      %908 = vmatprep.mubr.bf16.mxu0 0
      %909 = vmatmul.mubr.bf16.gmra.mrb[0].mxu0 %v831
      %v910 = vpop.f32.mrb[0].mxu0
      %v911 = vadd.f32 %v794, %v910
      %v912 = vpop.f32.mrb[0].mxu0
      %v913 = vpop.f32.mrb[0].mxu0
      %v914 = vadd.f32 %v794, %v913
      %v915 = vpop.f32.mrb[0].mxu0
      %916 = vdwg.mxu0
      %v917 = vpack.c.bf16 %v645, %v644
      %v918 = vpack.c.bf16 %v647, %v646
      %v919 = vpack.c.bf16 %v649, %v648
      %v920 = vpack.c.bf16 %v872, %v868
      %vm921 = vcmask 97280
      %v923 = vsel %vm921, %v917, 0
      %v926 = vsel %vm921, %v918, 0
      %v929 = vsel %vm921, %v919, 0
      %vm931 = vcmask 1045504
      %v933 = vsel %vm931, %v920, 0
      %935 = vmatprep.subr.bf16.mxu0 0
      %936 = vmatpush1.bf16.msra.mxu0 %v933
      %937 = vmatprep.subr.bf16.mxu0 0
      %938 = vmatpush1.bf16.msra.mxu0 0
      %939 = vmatprep.subr.bf16.mxu0 0
      %940 = vmatpush1.bf16.msra.mxu0 0
      %941 = vmatprep.subr.bf16.mxu0 0
      %942 = vmatpush1.bf16.msra.mxu0 0
      %943 = vmatprep.subr.bf16.mxu0 0
      %944 = vmatpush1.bf16.msra.mxu0 0
      %945 = vmatprep.subr.bf16.mxu0 0
      %946 = vmatpush1.bf16.msra.mxu0 0
      %947 = vmatprep.subr.bf16.mxu0 0
      %948 = vmatpush1.bf16.msra.mxu0 0
      %949 = vmatprep.subr.bf16.mxu0 0
      %950 = vmatpush1.bf16.msra.mxu0 0
      %951 = vmatprep.subr.bf16.mxu0 0
      %952 = vmatpush1.bf16.msra.mxu0 0
      %953 = vmatprep.subr.bf16.mxu0 0
      %954 = vmatpush1.bf16.msra.mxu0 0
      %955 = vmatprep.subr.bf16.mxu0 0
      %956 = vmatpush1.bf16.msra.mxu0 0
      %957 = vmatprep.subr.bf16.mxu0 0
      %958 = vmatpush1.bf16.msra.mxu0 0
      %959 = vmatprep.subr.bf16.mxu0 0
      %960 = vmatpush1.bf16.msra.mxu0 0
      %961 = vmatprep.subr.bf16.mxu0 0
      %962 = vmatpush1.bf16.msra.mxu0 0
      %963 = vmatprep.subr.bf16.mxu0 0
      %964 = vmatpush1.bf16.msra.mxu0 0
      %965 = vmatprep.subr.bf16.mxu0 0
      %966 = vmatpush1.bf16.msra.mxu0 0
      %967 = vmatprep.mubr.bf16.mxu0 0
      %968 = vmatmul.mubr.bf16.gmra.mrb[0].mxu0 %v923
      %v969 = vpop.f32.mrb[0].mxu0
      %v970 = vadd.f32 0.0, %v969
      %v971 = vpop.f32.mrb[0].mxu0
      %v972 = vpop.f32.mrb[0].mxu0
      %v973 = vadd.f32 0.0, %v972
      %v974 = vpop.f32.mrb[0].mxu0
      %975 = vmatprep.mubr.bf16.mxu0 0
      %976 = vmatmul.mubr.bf16.gmra.mrb[0].mxu0 %v926
      %v977 = vpop.f32.mrb[0].mxu0
      %v978 = vadd.f32 0.0, %v977
      %v979 = vpop.f32.mrb[0].mxu0
      %v980 = vpop.f32.mrb[0].mxu0
      %v981 = vadd.f32 0.0, %v980
      %v982 = vpop.f32.mrb[0].mxu0
      %983 = vmatprep.mubr.bf16.mxu0 0
      %984 = vmatmul.mubr.bf16.gmra.mrb[0].mxu0 %v929
      %v985 = vpop.f32.mrb[0].mxu0
      %v986 = vadd.f32 0.0, %v985
      %v987 = vpop.f32.mrb[0].mxu0
      %v988 = vpop.f32.mrb[0].mxu0
      %v989 = vadd.f32 0.0, %v988
      %v990 = vpop.f32.mrb[0].mxu0
      %991 = vdwg.mxu0
      %v992 = vmul.f32 %v970, %v650
      %v993 = vmul.f32 %v973, %v651
      %v994 = vmul.f32 %v978, %v652
      %v995 = vmul.f32 %v981, %v653
      %v996 = vmul.f32 %v986, %v654
      %v997 = vmul.f32 %v989, %v655
      %v998 = vpack.c.bf16 %v993, %v992
      %v999 = vpack.c.bf16 %v995, %v994
      %v1000 = vpack.c.bf16 %v997, %v996
      %v1001 = vpack.c.bf16 %v874, %v870
      %1002 = vmatprep.subr.bf16.mxu0 0
      %1003 = vmatpush1.bf16.xpose.msra.mxu0 %v1001
      %1004 = vmatprep.subr.bf16.mxu0 0
      %1005 = vmatpush1.bf16.xpose.msra.mxu0 0
      %1006 = vmatprep.subr.bf16.mxu0 0
      %1007 = vmatpush1.bf16.xpose.msra.mxu0 0
      %1008 = vmatprep.subr.bf16.mxu0 0
      %1009 = vmatpush1.bf16.xpose.msra.mxu0 0
      %1010 = vmatprep.subr.bf16.mxu0 0
      %1011 = vmatpush1.bf16.xpose.msra.mxu0 0
      %1012 = vmatprep.subr.bf16.mxu0 0
      %1013 = vmatpush1.bf16.xpose.msra.mxu0 0
      %1014 = vmatprep.subr.bf16.mxu0 0
      %1015 = vmatpush1.bf16.xpose.msra.mxu0 0
      %1016 = vmatprep.subr.bf16.mxu0 0
      %1017 = vmatpush1.bf16.xpose.msra.mxu0 0
      %1018 = vmatprep.subr.bf16.mxu0 0
      %1019 = vmatpush1.bf16.xpose.msra.mxu0 0
      %1020 = vmatprep.subr.bf16.mxu0 0
      %1021 = vmatpush1.bf16.xpose.msra.mxu0 0
      %1022 = vmatprep.subr.bf16.mxu0 0
      %1023 = vmatpush1.bf16.xpose.msra.mxu0 0
      %1024 = vmatprep.subr.bf16.mxu0 0
      %1025 = vmatpush1.bf16.xpose.msra.mxu0 0
      %1026 = vmatprep.subr.bf16.mxu0 0
      %1027 = vmatpush1.bf16.xpose.msra.mxu0 0
      %1028 = vmatprep.subr.bf16.mxu0 0
      %1029 = vmatpush1.bf16.xpose.msra.mxu0 0
      %1030 = vmatprep.subr.bf16.mxu0 0
      %1031 = vmatpush1.bf16.xpose.msra.mxu0 0
      %1032 = vmatprep.subr.bf16.mxu0 0
      %1033 = vmatpush1.bf16.xpose.msra.mxu0 0
      %1034 = vmatprep.mubr.bf16.mxu0 0
      %1035 = vmatmul.mubr.bf16.gmra.mrb[0].mxu0 %v998
      %v1036 = vpop.f32.mrb[0].mxu0
      %v1037 = vadd.f32 %v658, %v1036
      %v1038 = vpop.f32.mrb[0].mxu0
      %v1039 = vpop.f32.mrb[0].mxu0
      %v1040 = vadd.f32 %v659, %v1039
      %v1041 = vpop.f32.mrb[0].mxu0
      %1042 = vmatprep.mubr.bf16.mxu0 0
      %1043 = vmatmul.mubr.bf16.gmra.mrb[0].mxu0 %v999
      %v1044 = vpop.f32.mrb[0].mxu0
      %v1045 = vadd.f32 %v660, %v1044
      %v1046 = vpop.f32.mrb[0].mxu0
      %v1047 = vpop.f32.mrb[0].mxu0
      %v1048 = vadd.f32 %v661, %v1047
      %v1049 = vpop.f32.mrb[0].mxu0
      %1050 = vmatprep.mubr.bf16.mxu0 0
      %1051 = vmatmul.mubr.bf16.gmra.mrb[0].mxu0 %v1000
      %v1052 = vpop.f32.mrb[0].mxu0
      %v1053 = vadd.f32 %v662, %v1052
      %v1054 = vpop.f32.mrb[0].mxu0
      %v1055 = vpop.f32.mrb[0].mxu0
      %v1056 = vadd.f32 %v663, %v1055
      %v1057 = vpop.f32.mrb[0].mxu0
      %1058 = vdwg.mxu0
      %v1059 = vsel %vm921, %v1037, -inf
      %1060 = vmax.xlane.f32.xlu0 %v1059
      %v1061 = vpop.xlane.xlu0 %1060
      %v1062 = vsel %vm921, %v1040, -inf
      %1063 = vmax.xlane.f32.xlu0 %v1062
      %v1064 = vpop.xlane.xlu0 %1063
      %v1065 = vsel %vm921, %v1045, -inf
      %1066 = vmax.xlane.f32.xlu0 %v1065
      %v1067 = vpop.xlane.xlu0 %1066
      %v1068 = vsel %vm921, %v1048, -inf
      %1069 = vmax.xlane.f32.xlu0 %v1068
      %v1070 = vpop.xlane.xlu0 %1069
      %v1071 = vsel %vm921, %v1053, -inf
      %1072 = vmax.xlane.f32.xlu0 %v1071
      %v1073 = vpop.xlane.xlu0 %1072
      %v1074 = vsel %vm921, %v1056, -inf
      %1075 = vmax.xlane.f32.xlu0 %v1074
      %v1076 = vpop.xlane.xlu0 %1075
      %v1077 = vsub.f32 %v1037, %v1061
      %v1078 = vsub.f32 %v1040, %v1064
      %v1079 = vsub.f32 %v1045, %v1067
      %v1080 = vsub.f32 %v1048, %v1070
      %v1081 = vsub.f32 %v1053, %v1073
      %v1082 = vsub.f32 %v1056, %v1076
      %v1083 = vmul.f32 %v1077, 1.442695
      %v1084 = vpow.pop %v1083
      %v1085 = vmul.f32 %v1078, 1.442695
      %v1086 = vpow.pop %v1085
      %v1087 = vmul.f32 %v1079, 1.442695
      %v1088 = vpow.pop %v1087
      %v1089 = vmul.f32 %v1080, 1.442695
      %v1090 = vpow.pop %v1089
      %v1091 = vmul.f32 %v1081, 1.442695
      %v1092 = vpow.pop %v1091
      %v1093 = vmul.f32 %v1082, 1.442695
      %v1094 = vpow.pop %v1093
      %v1095 = vsel %vm921, %v1084, 0.0
      %1096 = vadd.xlane.f32.xlu0 %v1095
      %v1097 = vpop.xlane.xlu0 %1096
      %v1098 = vsel %vm921, %v1086, 0.0
      %1099 = vadd.xlane.f32.xlu0 %v1098
      %v1100 = vpop.xlane.xlu0 %1099
      %v1101 = vsel %vm921, %v1088, 0.0
      %1102 = vadd.xlane.f32.xlu0 %v1101
      %v1103 = vpop.xlane.xlu0 %1102
      %v1104 = vsel %vm921, %v1090, 0.0
      %1105 = vadd.xlane.f32.xlu0 %v1104
      %v1106 = vpop.xlane.xlu0 %1105
      %v1107 = vsel %vm921, %v1092, 0.0
      %1108 = vadd.xlane.f32.xlu0 %v1107
      %v1109 = vpop.xlane.xlu0 %1108
      %v1110 = vsel %vm921, %v1094, 0.0
      %1111 = vadd.xlane.f32.xlu0 %v1110
      %v1112 = vpop.xlane.xlu0 %1111
      %v1113 = vrcp.pop %v1097
      %v1114 = vrcp.pop %v1100
      %v1115 = vrcp.pop %v1103
      %v1116 = vrcp.pop %v1106
      %v1117 = vrcp.pop %v1109
      %v1118 = vrcp.pop %v1112
      %v1119 = vmul.f32 %v1084, %v1113
      %v1120 = vmul.f32 %v1086, %v1114
      %v1121 = vmul.f32 %v1088, %v1115
      %v1122 = vmul.f32 %v1090, %v1116
      %v1123 = vmul.f32 %v1092, %v1117
      %v1124 = vmul.f32 %v1094, %v1118
      %v1125 = vpack.c.bf16 %v1120, %v1119
      %v1126 = vpack.c.bf16 %v1122, %v1121
      %v1127 = vpack.c.bf16 %v1124, %v1123
      %v1128 = vpack.c.bf16 %v914, %v911
      %v1130 = vsel %vm921, %v1125, 0
      %v1133 = vsel %vm921, %v1126, 0
      %v1136 = vsel %vm921, %v1127, 0
      %v1139 = vsel %vm931, %v1128, 0
      %1141 = vmatprep.subr.bf16.mxu0 0
      %1142 = vmatpush1.bf16.msra.mxu0 %v1139
      %1143 = vmatprep.subr.bf16.mxu0 0
      %1144 = vmatpush1.bf16.msra.mxu0 0
      %1145 = vmatprep.subr.bf16.mxu0 0
      %1146 = vmatpush1.bf16.msra.mxu0 0
      %1147 = vmatprep.subr.bf16.mxu0 0
      %1148 = vmatpush1.bf16.msra.mxu0 0
      %1149 = vmatprep.subr.bf16.mxu0 0
      %1150 = vmatpush1.bf16.msra.mxu0 0
      %1151 = vmatprep.subr.bf16.mxu0 0
      %1152 = vmatpush1.bf16.msra.mxu0 0
      %1153 = vmatprep.subr.bf16.mxu0 0
      %1154 = vmatpush1.bf16.msra.mxu0 0
      %1155 = vmatprep.subr.bf16.mxu0 0
      %1156 = vmatpush1.bf16.msra.mxu0 0
      %1157 = vmatprep.subr.bf16.mxu0 0
      %1158 = vmatpush1.bf16.msra.mxu0 0
      %1159 = vmatprep.subr.bf16.mxu0 0
      %1160 = vmatpush1.bf16.msra.mxu0 0
      %1161 = vmatprep.subr.bf16.mxu0 0
      %1162 = vmatpush1.bf16.msra.mxu0 0
      %1163 = vmatprep.subr.bf16.mxu0 0
      %1164 = vmatpush1.bf16.msra.mxu0 0
      %1165 = vmatprep.subr.bf16.mxu0 0
      %1166 = vmatpush1.bf16.msra.mxu0 0
      %1167 = vmatprep.subr.bf16.mxu0 0
      %1168 = vmatpush1.bf16.msra.mxu0 0
      %1169 = vmatprep.subr.bf16.mxu0 0
      %1170 = vmatpush1.bf16.msra.mxu0 0
      %1171 = vmatprep.subr.bf16.mxu0 0
      %1172 = vmatpush1.bf16.msra.mxu0 0
      %1173 = vmatprep.mubr.bf16.mxu0 0
      %1174 = vmatmul.mubr.bf16.gmra.mrb[0].mxu0 %v1130
      %v1175 = vpop.f32.mrb[0].mxu0
      %v1176 = vadd.f32 0.0, %v1175
      %v1177 = vpop.f32.mrb[0].mxu0
      %v1178 = vpop.f32.mrb[0].mxu0
      %v1179 = vadd.f32 0.0, %v1178
      %v1180 = vpop.f32.mrb[0].mxu0
      %1181 = vmatprep.mubr.bf16.mxu0 0
      %1182 = vmatmul.mubr.bf16.gmra.mrb[0].mxu0 %v1133
      %v1183 = vpop.f32.mrb[0].mxu0
      %v1184 = vadd.f32 0.0, %v1183
      %v1185 = vpop.f32.mrb[0].mxu0
      %v1186 = vpop.f32.mrb[0].mxu0
      %v1187 = vadd.f32 0.0, %v1186
      %v1188 = vpop.f32.mrb[0].mxu0
      %1189 = vmatprep.mubr.bf16.mxu0 0
      %1190 = vmatmul.mubr.bf16.gmra.mrb[0].mxu0 %v1136
      %v1191 = vpop.f32.mrb[0].mxu0
      %v1192 = vadd.f32 0.0, %v1191
      %v1193 = vpop.f32.mrb[0].mxu0
      %v1194 = vpop.f32.mrb[0].mxu0
      %v1195 = vadd.f32 0.0, %v1194
      %v1196 = vpop.f32.mrb[0].mxu0
      %1197 = vdwg.mxu0
      %v1198 = vmul.f32 %v1176, %v650
      %v1199 = vmul.f32 %v1179, %v651
      %v1200 = vmul.f32 %v1184, %v652
      %v1201 = vmul.f32 %v1187, %v653
      %v1202 = vmul.f32 %v1192, %v654
      %v1203 = vmul.f32 %v1195, %v655
      %v1204 = vpack.c.bf16 %v657, %v656
      %v1205 = vpack.c.bf16 %v1199, %v1198
      %v1206 = vpack.c.bf16 %v1201, %v1200
      %v1207 = vpack.c.bf16 %v1203, %v1202
      %vm1208 = vcmask 392192
      %v1210 = vsel %vm1208, %v1204, 0
      %1212 = vmatprep.subr.bf16.mxu0 0
      %1213 = vmatpush1.bf16.msra.mxu0 %v1205
      %1214 = vmatprep.subr.bf16.mxu0 0
      %1215 = vmatpush1.bf16.msra.mxu0 %v1206
      %1216 = vmatprep.subr.bf16.mxu0 0
      %1217 = vmatpush1.bf16.msra.mxu0 %v1207
      %1218 = vmatprep.subr.bf16.mxu0 0
      %1219 = vmatpush1.bf16.msra.mxu0 0
      %1220 = vmatprep.subr.bf16.mxu0 0
      %1221 = vmatpush1.bf16.msra.mxu0 0
      %1222 = vmatprep.subr.bf16.mxu0 0
      %1223 = vmatpush1.bf16.msra.mxu0 0
      %1224 = vmatprep.subr.bf16.mxu0 0
      %1225 = vmatpush1.bf16.msra.mxu0 0
      %1226 = vmatprep.subr.bf16.mxu0 0
      %1227 = vmatpush1.bf16.msra.mxu0 0
      %1228 = vmatprep.subr.bf16.mxu0 0
      %1229 = vmatpush1.bf16.msra.mxu0 0
      %1230 = vmatprep.subr.bf16.mxu0 0
      %1231 = vmatpush1.bf16.msra.mxu0 0
      %1232 = vmatprep.subr.bf16.mxu0 0
      %1233 = vmatpush1.bf16.msra.mxu0 0
      %1234 = vmatprep.subr.bf16.mxu0 0
      %1235 = vmatpush1.bf16.msra.mxu0 0
      %1236 = vmatprep.subr.bf16.mxu0 0
      %1237 = vmatpush1.bf16.msra.mxu0 0
      %1238 = vmatprep.subr.bf16.mxu0 0
      %1239 = vmatpush1.bf16.msra.mxu0 0
      %1240 = vmatprep.subr.bf16.mxu0 0
      %1241 = vmatpush1.bf16.msra.mxu0 0
      %1242 = vmatprep.subr.bf16.mxu0 0
      %1243 = vmatpush1.bf16.msra.mxu0 0
      %1244 = vmatprep.mubr.bf16.mxu0 0
      %1245 = vmatmul.mubr.bf16.gmra.mrb[0].mxu0 %v1210
      %v1246 = vpop.f32.mrb[0].mxu0
      %v1247 = vadd.f32 0.0, %v1246
      %v1248 = vpop.f32.mrb[0].mxu0
      %v1249 = vpop.f32.mrb[0].mxu0
      %v1250 = vadd.f32 0.0, %v1249
      %v1251 = vpop.f32.mrb[0].mxu0
      %1252 = vdwg.mxu0
      %v1253 = vld [vmem:[%s11] sm:$0xf]
      %v1254 = vld [vmem:[%s11 + $0x4] sm:$0xf]
      %v1255 = vld [vmem:[%s11 + $0x8] sm:$0xf]
      %v1256 = vld [vmem:[%s11 + $0xc] sm:$0xf]
      %v1257 = vld [vmem:[%s11 + $0x10] sm:$0xf]
      %v1258 = vld [vmem:[%s11 + $0x14] sm:$0xf]
      %v1259 = vld [vmem:[%s11 + $0x18] sm:$0xf]
      %v1260 = vld [vmem:[%s11 + $0x1c] sm:$0xf]
      %v1261 = vld [vmem:[%s11 + $0x20] sm:$0xf]
      %v1262 = vld [vmem:[%s11 + $0x24] sm:$0xf]
      %v1263 = vld [vmem:[%s11 + $0x28] sm:$0xf]
      %v1264 = vld [vmem:[%s11 + $0x2c] sm:$0xf]
      %v1265 = vld [vmem:[%s11 + $0x30] sm:$0xf]
      %v1266 = vld [vmem:[%s11 + $0x34] sm:$0xf]
      %v1267 = vld [vmem:[%s11 + $0x38] sm:$0xf]
      %v1268 = vld [vmem:[%s11 + $0x3c] sm:$0xf]
      %v1269 = vpack.c.bf16 %v1250, %v1247
      %v1270 = vld [vmem:[%s12] sm:$0x1]
      %v1272 = vlaneseq
      %v1273 = vshrl.u32 %v1272, 7
      %v1274 = vsub.s32 0, %v1273
      %v1275 = vrot.slane %v1270, %v1274
      %v1293 = vunpack.c.l.b16 %v1253
      %v1294 = vunpack.c.l.b16 %v1254
      %v1295 = vunpack.c.l.b16 %v1255
      %v1296 = vunpack.c.l.b16 %v1256
      %v1297 = vunpack.c.l.b16 %v1257
      %v1298 = vunpack.c.l.b16 %v1258
      %v1299 = vunpack.c.l.b16 %v1259
      %v1300 = vunpack.c.l.b16 %v1260
      %v1301 = vunpack.c.l.b16 %v1261
      %v1302 = vunpack.c.l.b16 %v1262
      %v1303 = vunpack.c.l.b16 %v1263
      %v1304 = vunpack.c.l.b16 %v1264
      %v1305 = vunpack.c.l.b16 %v1265
      %v1306 = vunpack.c.l.b16 %v1266
      %v1307 = vunpack.c.l.b16 %v1267
      %v1308 = vunpack.c.l.b16 %v1268
      %v1309 = vpack.c.b16 %v1294, %v1293
      %v1310 = vpack.c.b16 %v1296, %v1295
      %v1311 = vpack.c.b16 %v1298, %v1297
      %v1312 = vpack.c.b16 %v1300, %v1299
      %v1313 = vpack.c.b16 %v1302, %v1301
      %v1314 = vpack.c.b16 %v1304, %v1303
      %v1315 = vpack.c.b16 %v1306, %v1305
      %v1316 = vpack.c.b16 %v1308, %v1307
      %1325 = vmatprep.subr.bf16.mxu0 0
      %1326 = vmatpush1.bf16.msra.mxu0 %v1309
      %1327 = vmatprep.subr.bf16.mxu0 0
      %1328 = vmatpush1.bf16.msra.mxu0 %v1310
      %1329 = vmatprep.subr.bf16.mxu0 0
      %1330 = vmatpush1.bf16.msra.mxu0 %v1311
      %1331 = vmatprep.subr.bf16.mxu0 0
      %1332 = vmatpush1.bf16.msra.mxu0 %v1312
      %1333 = vmatprep.subr.bf16.mxu0 0
      %1334 = vmatpush1.bf16.msra.mxu0 %v1313
      %1335 = vmatprep.subr.bf16.mxu0 0
      %1336 = vmatpush1.bf16.msra.mxu0 %v1314
      %1337 = vmatprep.subr.bf16.mxu0 0
      %1338 = vmatpush1.bf16.msra.mxu0 %v1315
      %1339 = vmatprep.subr.bf16.mxu0 0
      %1340 = vmatpush1.bf16.msra.mxu0 %v1316
      %1341 = vmatprep.subr.bf16.mxu0 0
      %1342 = vmatpush1.bf16.msra.mxu0 0
      %1343 = vmatprep.subr.bf16.mxu0 0
      %1344 = vmatpush1.bf16.msra.mxu0 0
      %1345 = vmatprep.subr.bf16.mxu0 0
      %1346 = vmatpush1.bf16.msra.mxu0 0
      %1347 = vmatprep.subr.bf16.mxu0 0
      %1348 = vmatpush1.bf16.msra.mxu0 0
      %1349 = vmatprep.subr.bf16.mxu0 0
      %1350 = vmatpush1.bf16.msra.mxu0 0
      %1351 = vmatprep.subr.bf16.mxu0 0
      %1352 = vmatpush1.bf16.msra.mxu0 0
      %1353 = vmatprep.subr.bf16.mxu0 0
      %1354 = vmatpush1.bf16.msra.mxu0 0
      %1355 = vmatprep.subr.bf16.mxu0 0
      %1356 = vmatpush1.bf16.msra.mxu0 0
      %1357 = vmatprep.mubr.bf16.mxu0 0
      %1358 = vmatmul.mubr.bf16.gmra.mrb[0].mxu0 %v1269
      %v1359 = vpop.f32.mrb[0].mxu0
      %v1360 = vadd.f32 %v1275, %v1359
      %v1361 = vpop.f32.mrb[0].mxu0
      %v1362 = vpop.f32.mrb[0].mxu0
      %v1363 = vadd.f32 %v1275, %v1362
      %v1364 = vpop.f32.mrb[0].mxu0
      %1365 = vdwg.mxu0
      %v1366 = vadd.f32 %v1360, %v719
      %v1367 = vadd.f32 %v1363, %v722
      %v1368 = vld [vmem:[%s13] sm:$0x1]
      %v1369 = vld [vmem:[%s14] sm:$0x1]
      %v1370 = vsel %vm727, %v1366, 0.0
      %1371 = vadd.xlane.f32.xlu0 %v1370
      %v1372 = vpop.xlane.xlu0 %1371
      %v1373 = vsel %vm731, %v1367, 0.0
      %1374 = vadd.xlane.f32.xlu0 %v1373
      %v1375 = vpop.xlane.xlu0 %1374
      %v1376 = vmul.f32 %v1372, %v735
      %v1377 = vmul.f32 %v1375, %v735
      %v1378 = vsub.f32 %v1366, %v1376
      %v1379 = vsub.f32 %v1367, %v1377
      %v1380 = vmul.f32 %v1378, %v1378
      %v1381 = vmul.f32 %v1379, %v1379
      %v1382 = vsel %vm727, %v1380, 0.0
      %1383 = vadd.xlane.f32.xlu0 %v1382
      %v1384 = vpop.xlane.xlu0 %1383
      %v1385 = vsel %vm731, %v1381, 0.0
      %1386 = vadd.xlane.f32.xlu0 %v1385
      %v1387 = vpop.xlane.xlu0 %1386
      %v1388 = vmul.f32 %v1384, %v735
      %v1389 = vmul.f32 %v1387, %v735
      %v1390 = vadd.f32 %v1388, 1e-05
      %v1391 = vadd.f32 %v1389, 1e-05
      %v1392 = vrsqrt.pop %v1390
      %v1393 = vrsqrt.pop %v1391
      %v1394 = vmul.f32 %v1378, %v1392
      %v1395 = vmul.f32 %v1379, %v1393
      %v1397 = vlaneseq
      %v1398 = vshrl.u32 %v1397, 7
      %v1399 = vsub.s32 0, %v1398
      %v1400 = vrot.slane %v1368, %v1399
      %v1402 = vmul.f32 %v1394, %v1400
      %v1403 = vmul.f32 %v1395, %v1400
      %v1405 = vlaneseq
      %v1406 = vshrl.u32 %v1405, 7
      %v1407 = vsub.s32 0, %v1406
      %v1408 = vrot.slane %v1369, %v1407
      %v1410 = vadd.f32 %v1402, %v1408
      %v1411 = vadd.f32 %v1403, %v1408
      %v1412 = vld [vmem:[%s15] sm:$0xf]
      %v1413 = vld [vmem:[%s15 + $0x4] sm:$0xf]
      %v1414 = vld [vmem:[%s15 + $0x8] sm:$0xf]
      %v1415 = vld [vmem:[%s15 + $0xc] sm:$0xf]
      %v1416 = vpack.c.bf16 %v1411, %v1410
      %v1417 = vld [vmem:[%s16] sm:$0x1]
      %v1419 = vlaneseq
      %v1420 = vshrl.u32 %v1419, 7
      %v1421 = vsub.s32 0, %v1420
      %v1422 = vrot.slane %v1417, %v1421
      %v1428 = vunpack.c.l.b16 %v1412
      %v1429 = vunpack.c.l.b16 %v1413
      %v1430 = vunpack.c.l.b16 %v1414
      %v1431 = vunpack.c.l.b16 %v1415
      %v1432 = vpack.c.b16 %v1429, %v1428
      %v1433 = vpack.c.b16 %v1431, %v1430
      %v1437 = vsel %vm727, %v1416, 0
      %1439 = vmatprep.subr.bf16.mxu0 0
      %1440 = vmatpush1.bf16.msra.mxu0 %v1432
      %1441 = vmatprep.subr.bf16.mxu0 0
      %1442 = vmatpush1.bf16.msra.mxu0 %v1433
      %1443 = vmatprep.subr.bf16.mxu0 0
      %1444 = vmatpush1.bf16.msra.mxu0 0
      %1445 = vmatprep.subr.bf16.mxu0 0
      %1446 = vmatpush1.bf16.msra.mxu0 0
      %1447 = vmatprep.subr.bf16.mxu0 0
      %1448 = vmatpush1.bf16.msra.mxu0 0
      %1449 = vmatprep.subr.bf16.mxu0 0
      %1450 = vmatpush1.bf16.msra.mxu0 0
      %1451 = vmatprep.subr.bf16.mxu0 0
      %1452 = vmatpush1.bf16.msra.mxu0 0
      %1453 = vmatprep.subr.bf16.mxu0 0
      %1454 = vmatpush1.bf16.msra.mxu0 0
      %1455 = vmatprep.subr.bf16.mxu0 0
      %1456 = vmatpush1.bf16.msra.mxu0 0
      %1457 = vmatprep.subr.bf16.mxu0 0
      %1458 = vmatpush1.bf16.msra.mxu0 0
      %1459 = vmatprep.subr.bf16.mxu0 0
      %1460 = vmatpush1.bf16.msra.mxu0 0
      %1461 = vmatprep.subr.bf16.mxu0 0
      %1462 = vmatpush1.bf16.msra.mxu0 0
      %1463 = vmatprep.subr.bf16.mxu0 0
      %1464 = vmatpush1.bf16.msra.mxu0 0
      %1465 = vmatprep.subr.bf16.mxu0 0
      %1466 = vmatpush1.bf16.msra.mxu0 0
      %1467 = vmatprep.subr.bf16.mxu0 0
      %1468 = vmatpush1.bf16.msra.mxu0 0
      %1469 = vmatprep.subr.bf16.mxu0 0
      %1470 = vmatpush1.bf16.msra.mxu0 0
      %1471 = vmatprep.mubr.bf16.mxu0 0
      %1472 = vmatmul.mubr.bf16.gmra.mrb[0].mxu0 %v1437
      %v1473 = vpop.f32.mrb[0].mxu0
      %v1474 = vadd.f32 %v1422, %v1473
      %v1475 = vpop.f32.mrb[0].mxu0
      %v1476 = vpop.f32.mrb[0].mxu0
      %v1477 = vadd.f32 %v1422, %v1476
      %v1478 = vpop.f32.mrb[0].mxu0
      %1479 = vdwg.mxu0
      %v1480 = vadd.f32 %v1474, %v1366
      %v1481 = vadd.f32 %v1477, %v1367
      %s1482 = scalar_lea.vmem %s7, 1
      %v1483 = vld [vmem:[%s1482] sm:$0x1]
      %s1484 = scalar_lea.vmem %s8, 1
      %v1485 = vld [vmem:[%s1484] sm:$0x1]
      %v1486 = vsel %vm727, %v1480, 0.0
      %1487 = vadd.xlane.f32.xlu0 %v1486
      %v1488 = vpop.xlane.xlu0 %1487
      %v1489 = vsel %vm731, %v1481, 0.0
      %1490 = vadd.xlane.f32.xlu0 %v1489
      %v1491 = vpop.xlane.xlu0 %1490
      %v1492 = vmul.f32 %v1488, %v735
      %v1493 = vmul.f32 %v1491, %v735
      %v1494 = vsub.f32 %v1480, %v1492
      %v1495 = vsub.f32 %v1481, %v1493
      %v1496 = vmul.f32 %v1494, %v1494
      %v1497 = vmul.f32 %v1495, %v1495
      %v1498 = vsel %vm727, %v1496, 0.0
      %1499 = vadd.xlane.f32.xlu0 %v1498
      %v1500 = vpop.xlane.xlu0 %1499
      %v1501 = vsel %vm731, %v1497, 0.0
      %1502 = vadd.xlane.f32.xlu0 %v1501
      %v1503 = vpop.xlane.xlu0 %1502
      %v1504 = vmul.f32 %v1500, %v735
      %v1505 = vmul.f32 %v1503, %v735
      %v1506 = vadd.f32 %v1504, 1e-05
      %v1507 = vadd.f32 %v1505, 1e-05
      %v1508 = vrsqrt.pop %v1506
      %v1509 = vrsqrt.pop %v1507
      %v1510 = vmul.f32 %v1494, %v1508
      %v1511 = vmul.f32 %v1495, %v1509
      %v1513 = vlaneseq
      %v1514 = vshrl.u32 %v1513, 7
      %v1515 = vsub.s32 0, %v1514
      %v1516 = vrot.slane %v1483, %v1515
      %v1518 = vmul.f32 %v1510, %v1516
      %v1519 = vmul.f32 %v1511, %v1516
      %v1521 = vlaneseq
      %v1522 = vshrl.u32 %v1521, 7
      %v1523 = vsub.s32 0, %v1522
      %v1524 = vrot.slane %v1485, %v1523
      %v1526 = vadd.f32 %v1518, %v1524
      %v1527 = vadd.f32 %v1519, %v1524
      %s1528 = scalar_lea.vmem %s9, 48
      %v1529 = vld [vmem:[%s1528] sm:$0xff]
      %v1530 = vld [vmem:[%s1528 + $0x8] sm:$0xf]
      %v1531 = vld [vmem:[%s1528 + $0xc] sm:$0xff]
      %v1532 = vld [vmem:[%s1528 + $0x14] sm:$0xf]
      %v1533 = vld [vmem:[%s1528 + $0x18] sm:$0xff]
      %v1534 = vld [vmem:[%s1528 + $0x20] sm:$0xf]
      %v1535 = vld [vmem:[%s1528 + $0x24] sm:$0xff]
      %v1536 = vld [vmem:[%s1528 + $0x2c] sm:$0xf]
      %v1537 = vpack.c.bf16 %v1527, %v1526
      %s1538 = scalar_lea.vmem %s10, 3
      %v1539 = vld [vmem:[%s1538] sm:$0x7]
      %v1541 = vlaneseq
      %v1542 = vshrl.u32 %v1541, 7
      %v1543 = vsub.s32 0, %v1542
      %v1544 = vrot.slane %v1539, %v1543
      %v1545 = vlaneseq
      %v1546 = vshrl.u32 %v1545, 7
      %v1547 = vsub.s32 1, %v1546
      %v1548 = vrot.slane %v1539, %v1547
      %v1549 = vlaneseq
      %v1550 = vshrl.u32 %v1549, 7
      %v1551 = vsub.s32 2, %v1550
      %v1552 = vrot.slane %v1539, %v1551
      %v1564 = vunpack.c.l.b16 %v1529
      %v1565 = vunpack.c.h.b16 %v1529
      %v1566 = vunpack.c.l.b16 %v1530
      %v1567 = vunpack.c.l.b16 %v1531
      %v1568 = vunpack.c.h.b16 %v1531
      %v1569 = vunpack.c.l.b16 %v1532
      %v1570 = vunpack.c.l.b16 %v1533
      %v1571 = vunpack.c.h.b16 %v1533
      %v1572 = vunpack.c.l.b16 %v1534
      %v1573 = vunpack.c.l.b16 %v1535
      %v1574 = vunpack.c.h.b16 %v1535
      %v1575 = vunpack.c.l.b16 %v1536
      %v1576 = vpack.c.b16 %v1567, %v1564
      %v1577 = vpack.c.b16 %v1568, %v1565
      %v1578 = vpack.c.b16 %v1569, %v1566
      %v1579 = vpack.c.b16 %v1573, %v1570
      %v1580 = vpack.c.b16 %v1574, %v1571
      %v1581 = vpack.c.b16 %v1575, %v1572
      %v1589 = vsel %vm727, %v1537, 0
      %1591 = vmatprep.subr.bf16.mxu0 %v1577
      %1592 = vmatpush1.bf16.msra.mxu0 %v1576
      %1593 = vmatprep.subr.bf16.mxu0 %v1580
      %1594 = vmatpush1.bf16.msra.mxu0 %v1579
      %1595 = vmatprep.subr.bf16.mxu0 0
      %1596 = vmatpush1.bf16.msra.mxu0 0
      %1597 = vmatprep.subr.bf16.mxu0 0
      %1598 = vmatpush1.bf16.msra.mxu0 0
      %1599 = vmatprep.subr.bf16.mxu0 0
      %1600 = vmatpush1.bf16.msra.mxu0 0
      %1601 = vmatprep.subr.bf16.mxu0 0
      %1602 = vmatpush1.bf16.msra.mxu0 0
      %1603 = vmatprep.subr.bf16.mxu0 0
      %1604 = vmatpush1.bf16.msra.mxu0 0
      %1605 = vmatprep.subr.bf16.mxu0 0
      %1606 = vmatpush1.bf16.msra.mxu0 0
      %1607 = vmatprep.subr.bf16.mxu0 0
      %1608 = vmatpush1.bf16.msra.mxu0 0
      %1609 = vmatprep.subr.bf16.mxu0 0
      %1610 = vmatpush1.bf16.msra.mxu0 0
      %1611 = vmatprep.subr.bf16.mxu0 0
      %1612 = vmatpush1.bf16.msra.mxu0 0
      %1613 = vmatprep.subr.bf16.mxu0 0
      %1614 = vmatpush1.bf16.msra.mxu0 0
      %1615 = vmatprep.subr.bf16.mxu0 0
      %1616 = vmatpush1.bf16.msra.mxu0 0
      %1617 = vmatprep.subr.bf16.mxu0 0
      %1618 = vmatpush1.bf16.msra.mxu0 0
      %1619 = vmatprep.subr.bf16.mxu0 0
      %1620 = vmatpush1.bf16.msra.mxu0 0
      %1621 = vmatprep.subr.bf16.mxu0 0
      %1622 = vmatpush1.bf16.msra.mxu0 0
      %1623 = vmatprep.mubr.bf16.mxu0 0
      %1624 = vmatmul.mubr.bf16.gmra.mrb[0].mxu0 %v1589
      %v1625 = vpop.f32.mrb[0].mxu0
      %v1626 = vadd.f32 %v1544, %v1625
      %v1627 = vpop.f32.mrb[0].mxu0
      %v1628 = vadd.f32 %v1548, %v1627
      %v1629 = vpop.f32.mrb[0].mxu0
      %v1630 = vadd.f32 %v1544, %v1629
      %v1631 = vpop.f32.mrb[0].mxu0
      %v1632 = vadd.f32 %v1548, %v1631
      %1633 = vdwg.mxu0
      %1634 = vmatprep.subr.bf16.mxu0 0
      %1635 = vmatpush1.bf16.msra.mxu0 %v1578
      %1636 = vmatprep.subr.bf16.mxu0 0
      %1637 = vmatpush1.bf16.msra.mxu0 %v1581
      %1638 = vmatprep.subr.bf16.mxu0 0
      %1639 = vmatpush1.bf16.msra.mxu0 0
      %1640 = vmatprep.subr.bf16.mxu0 0
      %1641 = vmatpush1.bf16.msra.mxu0 0
      %1642 = vmatprep.subr.bf16.mxu0 0
      %1643 = vmatpush1.bf16.msra.mxu0 0
      %1644 = vmatprep.subr.bf16.mxu0 0
      %1645 = vmatpush1.bf16.msra.mxu0 0
      %1646 = vmatprep.subr.bf16.mxu0 0
      %1647 = vmatpush1.bf16.msra.mxu0 0
      %1648 = vmatprep.subr.bf16.mxu0 0
      %1649 = vmatpush1.bf16.msra.mxu0 0
      %1650 = vmatprep.subr.bf16.mxu0 0
      %1651 = vmatpush1.bf16.msra.mxu0 0
      %1652 = vmatprep.subr.bf16.mxu0 0
      %1653 = vmatpush1.bf16.msra.mxu0 0
      %1654 = vmatprep.subr.bf16.mxu0 0
      %1655 = vmatpush1.bf16.msra.mxu0 0
      %1656 = vmatprep.subr.bf16.mxu0 0
      %1657 = vmatpush1.bf16.msra.mxu0 0
      %1658 = vmatprep.subr.bf16.mxu0 0
      %1659 = vmatpush1.bf16.msra.mxu0 0
      %1660 = vmatprep.subr.bf16.mxu0 0
      %1661 = vmatpush1.bf16.msra.mxu0 0
      %1662 = vmatprep.subr.bf16.mxu0 0
      %1663 = vmatpush1.bf16.msra.mxu0 0
      %1664 = vmatprep.subr.bf16.mxu0 0
      %1665 = vmatpush1.bf16.msra.mxu0 0
      %1666 = vmatprep.mubr.bf16.mxu0 0
      %1667 = vmatmul.mubr.bf16.gmra.mrb[0].mxu0 %v1589
      %v1668 = vpop.f32.mrb[0].mxu0
      %v1669 = vadd.f32 %v1552, %v1668
      %v1670 = vpop.f32.mrb[0].mxu0
      %v1671 = vpop.f32.mrb[0].mxu0
      %v1672 = vadd.f32 %v1552, %v1671
      %v1673 = vpop.f32.mrb[0].mxu0
      %1674 = vdwg.mxu0
      %v1675 = vpack.c.bf16 %v1630, %v1626
      %v1677 = vsel %vm931, %v1675, 0
      %1679 = vmatprep.subr.bf16.mxu0 0
      %1680 = vmatpush1.bf16.msra.mxu0 %v1677
      %1681 = vmatprep.subr.bf16.mxu0 0
      %1682 = vmatpush1.bf16.msra.mxu0 0
      %1683 = vmatprep.subr.bf16.mxu0 0
      %1684 = vmatpush1.bf16.msra.mxu0 0
      %1685 = vmatprep.subr.bf16.mxu0 0
      %1686 = vmatpush1.bf16.msra.mxu0 0
      %1687 = vmatprep.subr.bf16.mxu0 0
      %1688 = vmatpush1.bf16.msra.mxu0 0
      %1689 = vmatprep.subr.bf16.mxu0 0
      %1690 = vmatpush1.bf16.msra.mxu0 0
      %1691 = vmatprep.subr.bf16.mxu0 0
      %1692 = vmatpush1.bf16.msra.mxu0 0
      %1693 = vmatprep.subr.bf16.mxu0 0
      %1694 = vmatpush1.bf16.msra.mxu0 0
      %1695 = vmatprep.subr.bf16.mxu0 0
      %1696 = vmatpush1.bf16.msra.mxu0 0
      %1697 = vmatprep.subr.bf16.mxu0 0
      %1698 = vmatpush1.bf16.msra.mxu0 0
      %1699 = vmatprep.subr.bf16.mxu0 0
      %1700 = vmatpush1.bf16.msra.mxu0 0
      %1701 = vmatprep.subr.bf16.mxu0 0
      %1702 = vmatpush1.bf16.msra.mxu0 0
      %1703 = vmatprep.subr.bf16.mxu0 0
      %1704 = vmatpush1.bf16.msra.mxu0 0
      %1705 = vmatprep.subr.bf16.mxu0 0
      %1706 = vmatpush1.bf16.msra.mxu0 0
      %1707 = vmatprep.subr.bf16.mxu0 0
      %1708 = vmatpush1.bf16.msra.mxu0 0
      %1709 = vmatprep.subr.bf16.mxu0 0
      %1710 = vmatpush1.bf16.msra.mxu0 0
      %1711 = vmatprep.mubr.bf16.mxu0 0
      %1712 = vmatmul.mubr.bf16.gmra.mrb[0].mxu0 %v923
      %v1713 = vpop.f32.mrb[0].mxu0
      %v1714 = vadd.f32 0.0, %v1713
      %v1715 = vpop.f32.mrb[0].mxu0
      %v1716 = vpop.f32.mrb[0].mxu0
      %v1717 = vadd.f32 0.0, %v1716
      %v1718 = vpop.f32.mrb[0].mxu0
      %1719 = vmatprep.mubr.bf16.mxu0 0
      %1720 = vmatmul.mubr.bf16.gmra.mrb[0].mxu0 %v926
      %v1721 = vpop.f32.mrb[0].mxu0
      %v1722 = vadd.f32 0.0, %v1721
      %v1723 = vpop.f32.mrb[0].mxu0
      %v1724 = vpop.f32.mrb[0].mxu0
      %v1725 = vadd.f32 0.0, %v1724
      %v1726 = vpop.f32.mrb[0].mxu0
      %1727 = vmatprep.mubr.bf16.mxu0 0
      %1728 = vmatmul.mubr.bf16.gmra.mrb[0].mxu0 %v929
      %v1729 = vpop.f32.mrb[0].mxu0
      %v1730 = vadd.f32 0.0, %v1729
      %v1731 = vpop.f32.mrb[0].mxu0
      %v1732 = vpop.f32.mrb[0].mxu0
      %v1733 = vadd.f32 0.0, %v1732
      %v1734 = vpop.f32.mrb[0].mxu0
      %1735 = vdwg.mxu0
      %v1736 = vmul.f32 %v1714, %v650
      %v1737 = vmul.f32 %v1717, %v651
      %v1738 = vmul.f32 %v1722, %v652
      %v1739 = vmul.f32 %v1725, %v653
      %v1740 = vmul.f32 %v1730, %v654
      %v1741 = vmul.f32 %v1733, %v655
      %v1742 = vpack.c.bf16 %v1737, %v1736
      %v1743 = vpack.c.bf16 %v1739, %v1738
      %v1744 = vpack.c.bf16 %v1741, %v1740
      %v1745 = vpack.c.bf16 %v1632, %v1628
      %1746 = vmatprep.subr.bf16.mxu0 0
      %1747 = vmatpush1.bf16.xpose.msra.mxu0 %v1745
      %1748 = vmatprep.subr.bf16.mxu0 0
      %1749 = vmatpush1.bf16.xpose.msra.mxu0 0
      %1750 = vmatprep.subr.bf16.mxu0 0
      %1751 = vmatpush1.bf16.xpose.msra.mxu0 0
      %1752 = vmatprep.subr.bf16.mxu0 0
      %1753 = vmatpush1.bf16.xpose.msra.mxu0 0
      %1754 = vmatprep.subr.bf16.mxu0 0
      %1755 = vmatpush1.bf16.xpose.msra.mxu0 0
      %1756 = vmatprep.subr.bf16.mxu0 0
      %1757 = vmatpush1.bf16.xpose.msra.mxu0 0
      %1758 = vmatprep.subr.bf16.mxu0 0
      %1759 = vmatpush1.bf16.xpose.msra.mxu0 0
      %1760 = vmatprep.subr.bf16.mxu0 0
      %1761 = vmatpush1.bf16.xpose.msra.mxu0 0
      %1762 = vmatprep.subr.bf16.mxu0 0
      %1763 = vmatpush1.bf16.xpose.msra.mxu0 0
      %1764 = vmatprep.subr.bf16.mxu0 0
      %1765 = vmatpush1.bf16.xpose.msra.mxu0 0
      %1766 = vmatprep.subr.bf16.mxu0 0
      %1767 = vmatpush1.bf16.xpose.msra.mxu0 0
      %1768 = vmatprep.subr.bf16.mxu0 0
      %1769 = vmatpush1.bf16.xpose.msra.mxu0 0
      %1770 = vmatprep.subr.bf16.mxu0 0
      %1771 = vmatpush1.bf16.xpose.msra.mxu0 0
      %1772 = vmatprep.subr.bf16.mxu0 0
      %1773 = vmatpush1.bf16.xpose.msra.mxu0 0
      %1774 = vmatprep.subr.bf16.mxu0 0
      %1775 = vmatpush1.bf16.xpose.msra.mxu0 0
      %1776 = vmatprep.subr.bf16.mxu0 0
      %1777 = vmatpush1.bf16.xpose.msra.mxu0 0
      %1778 = vmatprep.mubr.bf16.mxu0 0
      %1779 = vmatmul.mubr.bf16.gmra.mrb[0].mxu0 %v1742
      %v1780 = vpop.f32.mrb[0].mxu0
      %v1781 = vadd.f32 %v664, %v1780
      %v1782 = vpop.f32.mrb[0].mxu0
      %v1783 = vpop.f32.mrb[0].mxu0
      %v1784 = vadd.f32 %v665, %v1783
      %v1785 = vpop.f32.mrb[0].mxu0
      %1786 = vmatprep.mubr.bf16.mxu0 0
      %1787 = vmatmul.mubr.bf16.gmra.mrb[0].mxu0 %v1743
      %v1788 = vpop.f32.mrb[0].mxu0
      %v1789 = vadd.f32 %v666, %v1788
      %v1790 = vpop.f32.mrb[0].mxu0
      %v1791 = vpop.f32.mrb[0].mxu0
      %v1792 = vadd.f32 %v667, %v1791
      %v1793 = vpop.f32.mrb[0].mxu0
      %1794 = vmatprep.mubr.bf16.mxu0 0
      %1795 = vmatmul.mubr.bf16.gmra.mrb[0].mxu0 %v1744
      %v1796 = vpop.f32.mrb[0].mxu0
      %v1797 = vadd.f32 %v668, %v1796
      %v1798 = vpop.f32.mrb[0].mxu0
      %v1799 = vpop.f32.mrb[0].mxu0
      %v1800 = vadd.f32 %v669, %v1799
      %v1801 = vpop.f32.mrb[0].mxu0
      %1802 = vdwg.mxu0
      %v1803 = vsel %vm921, %v1781, -inf
      %1804 = vmax.xlane.f32.xlu0 %v1803
      %v1805 = vpop.xlane.xlu0 %1804
      %v1806 = vsel %vm921, %v1784, -inf
      %1807 = vmax.xlane.f32.xlu0 %v1806
      %v1808 = vpop.xlane.xlu0 %1807
      %v1809 = vsel %vm921, %v1789, -inf
      %1810 = vmax.xlane.f32.xlu0 %v1809
      %v1811 = vpop.xlane.xlu0 %1810
      %v1812 = vsel %vm921, %v1792, -inf
      %1813 = vmax.xlane.f32.xlu0 %v1812
      %v1814 = vpop.xlane.xlu0 %1813
      %v1815 = vsel %vm921, %v1797, -inf
      %1816 = vmax.xlane.f32.xlu0 %v1815
      %v1817 = vpop.xlane.xlu0 %1816
      %v1818 = vsel %vm921, %v1800, -inf
      %1819 = vmax.xlane.f32.xlu0 %v1818
      %v1820 = vpop.xlane.xlu0 %1819
      %v1821 = vsub.f32 %v1781, %v1805
      %v1822 = vsub.f32 %v1784, %v1808
      %v1823 = vsub.f32 %v1789, %v1811
      %v1824 = vsub.f32 %v1792, %v1814
      %v1825 = vsub.f32 %v1797, %v1817
      %v1826 = vsub.f32 %v1800, %v1820
      %v1827 = vmul.f32 %v1821, 1.442695
      %v1828 = vpow.pop %v1827
      %v1829 = vmul.f32 %v1822, 1.442695
      %v1830 = vpow.pop %v1829
      %v1831 = vmul.f32 %v1823, 1.442695
      %v1832 = vpow.pop %v1831
      %v1833 = vmul.f32 %v1824, 1.442695
      %v1834 = vpow.pop %v1833
      %v1835 = vmul.f32 %v1825, 1.442695
      %v1836 = vpow.pop %v1835
      %v1837 = vmul.f32 %v1826, 1.442695
      %v1838 = vpow.pop %v1837
      %v1839 = vsel %vm921, %v1828, 0.0
      %1840 = vadd.xlane.f32.xlu0 %v1839
      %v1841 = vpop.xlane.xlu0 %1840
      %v1842 = vsel %vm921, %v1830, 0.0
      %1843 = vadd.xlane.f32.xlu0 %v1842
      %v1844 = vpop.xlane.xlu0 %1843
      %v1845 = vsel %vm921, %v1832, 0.0
      %1846 = vadd.xlane.f32.xlu0 %v1845
      %v1847 = vpop.xlane.xlu0 %1846
      %v1848 = vsel %vm921, %v1834, 0.0
      %1849 = vadd.xlane.f32.xlu0 %v1848
      %v1850 = vpop.xlane.xlu0 %1849
      %v1851 = vsel %vm921, %v1836, 0.0
      %1852 = vadd.xlane.f32.xlu0 %v1851
      %v1853 = vpop.xlane.xlu0 %1852
      %v1854 = vsel %vm921, %v1838, 0.0
      %1855 = vadd.xlane.f32.xlu0 %v1854
      %v1856 = vpop.xlane.xlu0 %1855
      %v1857 = vrcp.pop %v1841
      %v1858 = vrcp.pop %v1844
      %v1859 = vrcp.pop %v1847
      %v1860 = vrcp.pop %v1850
      %v1861 = vrcp.pop %v1853
      %v1862 = vrcp.pop %v1856
      %v1863 = vmul.f32 %v1828, %v1857
      %v1864 = vmul.f32 %v1830, %v1858
      %v1865 = vmul.f32 %v1832, %v1859
      %v1866 = vmul.f32 %v1834, %v1860
      %v1867 = vmul.f32 %v1836, %v1861
      %v1868 = vmul.f32 %v1838, %v1862
      %v1869 = vpack.c.bf16 %v1864, %v1863
      %v1870 = vpack.c.bf16 %v1866, %v1865
      %v1871 = vpack.c.bf16 %v1868, %v1867
      %v1872 = vpack.c.bf16 %v1672, %v1669
      %v1874 = vsel %vm921, %v1869, 0
      %v1877 = vsel %vm921, %v1870, 0
      %v1880 = vsel %vm921, %v1871, 0
      %v1883 = vsel %vm931, %v1872, 0
      %1885 = vmatprep.subr.bf16.mxu0 0
      %1886 = vmatpush1.bf16.msra.mxu0 %v1883
      %1887 = vmatprep.subr.bf16.mxu0 0
      %1888 = vmatpush1.bf16.msra.mxu0 0
      %1889 = vmatprep.subr.bf16.mxu0 0
      %1890 = vmatpush1.bf16.msra.mxu0 0
      %1891 = vmatprep.subr.bf16.mxu0 0
      %1892 = vmatpush1.bf16.msra.mxu0 0
      %1893 = vmatprep.subr.bf16.mxu0 0
      %1894 = vmatpush1.bf16.msra.mxu0 0
      %1895 = vmatprep.subr.bf16.mxu0 0
      %1896 = vmatpush1.bf16.msra.mxu0 0
      %1897 = vmatprep.subr.bf16.mxu0 0
      %1898 = vmatpush1.bf16.msra.mxu0 0
      %1899 = vmatprep.subr.bf16.mxu0 0
      %1900 = vmatpush1.bf16.msra.mxu0 0
      %1901 = vmatprep.subr.bf16.mxu0 0
      %1902 = vmatpush1.bf16.msra.mxu0 0
      %1903 = vmatprep.subr.bf16.mxu0 0
      %1904 = vmatpush1.bf16.msra.mxu0 0
      %1905 = vmatprep.subr.bf16.mxu0 0
      %1906 = vmatpush1.bf16.msra.mxu0 0
      %1907 = vmatprep.subr.bf16.mxu0 0
      %1908 = vmatpush1.bf16.msra.mxu0 0
      %1909 = vmatprep.subr.bf16.mxu0 0
      %1910 = vmatpush1.bf16.msra.mxu0 0
      %1911 = vmatprep.subr.bf16.mxu0 0
      %1912 = vmatpush1.bf16.msra.mxu0 0
      %1913 = vmatprep.subr.bf16.mxu0 0
      %1914 = vmatpush1.bf16.msra.mxu0 0
      %1915 = vmatprep.subr.bf16.mxu0 0
      %1916 = vmatpush1.bf16.msra.mxu0 0
      %1917 = vmatprep.mubr.bf16.mxu0 0
      %1918 = vmatmul.mubr.bf16.gmra.mrb[0].mxu0 %v1874
      %v1919 = vpop.f32.mrb[0].mxu0
      %v1920 = vadd.f32 0.0, %v1919
      %v1921 = vpop.f32.mrb[0].mxu0
      %v1922 = vpop.f32.mrb[0].mxu0
      %v1923 = vadd.f32 0.0, %v1922
      %v1924 = vpop.f32.mrb[0].mxu0
      %1925 = vmatprep.mubr.bf16.mxu0 0
      %1926 = vmatmul.mubr.bf16.gmra.mrb[0].mxu0 %v1877
      %v1927 = vpop.f32.mrb[0].mxu0
      %v1928 = vadd.f32 0.0, %v1927
      %v1929 = vpop.f32.mrb[0].mxu0
      %v1930 = vpop.f32.mrb[0].mxu0
      %v1931 = vadd.f32 0.0, %v1930
      %v1932 = vpop.f32.mrb[0].mxu0
      %1933 = vmatprep.mubr.bf16.mxu0 0
      %1934 = vmatmul.mubr.bf16.gmra.mrb[0].mxu0 %v1880
      %v1935 = vpop.f32.mrb[0].mxu0
      %v1936 = vadd.f32 0.0, %v1935
      %v1937 = vpop.f32.mrb[0].mxu0
      %v1938 = vpop.f32.mrb[0].mxu0
      %v1939 = vadd.f32 0.0, %v1938
      %v1940 = vpop.f32.mrb[0].mxu0
      %1941 = vdwg.mxu0
      %v1942 = vmul.f32 %v1920, %v650
      %v1943 = vmul.f32 %v1923, %v651
      %v1944 = vmul.f32 %v1928, %v652
      %v1945 = vmul.f32 %v1931, %v653
      %v1946 = vmul.f32 %v1936, %v654
      %v1947 = vmul.f32 %v1939, %v655
      %v1948 = vpack.c.bf16 %v1943, %v1942
      %v1949 = vpack.c.bf16 %v1945, %v1944
      %v1950 = vpack.c.bf16 %v1947, %v1946
      %1951 = vmatprep.subr.bf16.mxu0 0
      %1952 = vmatpush1.bf16.msra.mxu0 %v1948
      %1953 = vmatprep.subr.bf16.mxu0 0
      %1954 = vmatpush1.bf16.msra.mxu0 %v1949
      %1955 = vmatprep.subr.bf16.mxu0 0
      %1956 = vmatpush1.bf16.msra.mxu0 %v1950
      %1957 = vmatprep.subr.bf16.mxu0 0
      %1958 = vmatpush1.bf16.msra.mxu0 0
      %1959 = vmatprep.subr.bf16.mxu0 0
      %1960 = vmatpush1.bf16.msra.mxu0 0
      %1961 = vmatprep.subr.bf16.mxu0 0
      %1962 = vmatpush1.bf16.msra.mxu0 0
      %1963 = vmatprep.subr.bf16.mxu0 0
      %1964 = vmatpush1.bf16.msra.mxu0 0
      %1965 = vmatprep.subr.bf16.mxu0 0
      %1966 = vmatpush1.bf16.msra.mxu0 0
      %1967 = vmatprep.subr.bf16.mxu0 0
      %1968 = vmatpush1.bf16.msra.mxu0 0
      %1969 = vmatprep.subr.bf16.mxu0 0
      %1970 = vmatpush1.bf16.msra.mxu0 0
      %1971 = vmatprep.subr.bf16.mxu0 0
      %1972 = vmatpush1.bf16.msra.mxu0 0
      %1973 = vmatprep.subr.bf16.mxu0 0
      %1974 = vmatpush1.bf16.msra.mxu0 0
      %1975 = vmatprep.subr.bf16.mxu0 0
      %1976 = vmatpush1.bf16.msra.mxu0 0
      %1977 = vmatprep.subr.bf16.mxu0 0
      %1978 = vmatpush1.bf16.msra.mxu0 0
      %1979 = vmatprep.subr.bf16.mxu0 0
      %1980 = vmatpush1.bf16.msra.mxu0 0
      %1981 = vmatprep.subr.bf16.mxu0 0
      %1982 = vmatpush1.bf16.msra.mxu0 0
      %1983 = vmatprep.mubr.bf16.mxu0 0
      %1984 = vmatmul.mubr.bf16.gmra.mrb[0].mxu0 %v1210
      %v1985 = vpop.f32.mrb[0].mxu0
      %v1986 = vadd.f32 0.0, %v1985
      %v1987 = vpop.f32.mrb[0].mxu0
      %v1988 = vpop.f32.mrb[0].mxu0
      %v1989 = vadd.f32 0.0, %v1988
      %v1990 = vpop.f32.mrb[0].mxu0
      %1991 = vdwg.mxu0
      %s1992 = scalar_lea.vmem %s11, 64
      %v1993 = vld [vmem:[%s1992] sm:$0xf]
      %v1994 = vld [vmem:[%s1992 + $0x4] sm:$0xf]
      %v1995 = vld [vmem:[%s1992 + $0x8] sm:$0xf]
      %v1996 = vld [vmem:[%s1992 + $0xc] sm:$0xf]
      %v1997 = vld [vmem:[%s1992 + $0x10] sm:$0xf]
      %v1998 = vld [vmem:[%s1992 + $0x14] sm:$0xf]
      %v1999 = vld [vmem:[%s1992 + $0x18] sm:$0xf]
      %v2000 = vld [vmem:[%s1992 + $0x1c] sm:$0xf]
      %v2001 = vld [vmem:[%s1992 + $0x20] sm:$0xf]
      %v2002 = vld [vmem:[%s1992 + $0x24] sm:$0xf]
      %v2003 = vld [vmem:[%s1992 + $0x28] sm:$0xf]
      %v2004 = vld [vmem:[%s1992 + $0x2c] sm:$0xf]
      %v2005 = vld [vmem:[%s1992 + $0x30] sm:$0xf]
      %v2006 = vld [vmem:[%s1992 + $0x34] sm:$0xf]
      %v2007 = vld [vmem:[%s1992 + $0x38] sm:$0xf]
      %v2008 = vld [vmem:[%s1992 + $0x3c] sm:$0xf]
      %v2009 = vpack.c.bf16 %v1989, %v1986
      %s2010 = scalar_lea.vmem %s12, 1
      %v2011 = vld [vmem:[%s2010] sm:$0x1]
      %v2013 = vlaneseq
      %v2014 = vshrl.u32 %v2013, 7
      %v2015 = vsub.s32 0, %v2014
      %v2016 = vrot.slane %v2011, %v2015
      %v2034 = vunpack.c.l.b16 %v1993
      %v2035 = vunpack.c.l.b16 %v1994
      %v2036 = vunpack.c.l.b16 %v1995
      %v2037 = vunpack.c.l.b16 %v1996
      %v2038 = vunpack.c.l.b16 %v1997
      %v2039 = vunpack.c.l.b16 %v1998
      %v2040 = vunpack.c.l.b16 %v1999
      %v2041 = vunpack.c.l.b16 %v2000
      %v2042 = vunpack.c.l.b16 %v2001
      %v2043 = vunpack.c.l.b16 %v2002
      %v2044 = vunpack.c.l.b16 %v2003
      %v2045 = vunpack.c.l.b16 %v2004
      %v2046 = vunpack.c.l.b16 %v2005
      %v2047 = vunpack.c.l.b16 %v2006
      %v2048 = vunpack.c.l.b16 %v2007
      %v2049 = vunpack.c.l.b16 %v2008
      %v2050 = vpack.c.b16 %v2035, %v2034
      %v2051 = vpack.c.b16 %v2037, %v2036
      %v2052 = vpack.c.b16 %v2039, %v2038
      %v2053 = vpack.c.b16 %v2041, %v2040
      %v2054 = vpack.c.b16 %v2043, %v2042
      %v2055 = vpack.c.b16 %v2045, %v2044
      %v2056 = vpack.c.b16 %v2047, %v2046
      %v2057 = vpack.c.b16 %v2049, %v2048
      %2066 = vmatprep.subr.bf16.mxu0 0
      %2067 = vmatpush1.bf16.msra.mxu0 %v2050
      %2068 = vmatprep.subr.bf16.mxu0 0
      %2069 = vmatpush1.bf16.msra.mxu0 %v2051
      %2070 = vmatprep.subr.bf16.mxu0 0
      %2071 = vmatpush1.bf16.msra.mxu0 %v2052
      %2072 = vmatprep.subr.bf16.mxu0 0
      %2073 = vmatpush1.bf16.msra.mxu0 %v2053
      %2074 = vmatprep.subr.bf16.mxu0 0
      %2075 = vmatpush1.bf16.msra.mxu0 %v2054
      %2076 = vmatprep.subr.bf16.mxu0 0
      %2077 = vmatpush1.bf16.msra.mxu0 %v2055
      %2078 = vmatprep.subr.bf16.mxu0 0
      %2079 = vmatpush1.bf16.msra.mxu0 %v2056
      %2080 = vmatprep.subr.bf16.mxu0 0
      %2081 = vmatpush1.bf16.msra.mxu0 %v2057
      %2082 = vmatprep.subr.bf16.mxu0 0
      %2083 = vmatpush1.bf16.msra.mxu0 0
      %2084 = vmatprep.subr.bf16.mxu0 0
      %2085 = vmatpush1.bf16.msra.mxu0 0
      %2086 = vmatprep.subr.bf16.mxu0 0
      %2087 = vmatpush1.bf16.msra.mxu0 0
      %2088 = vmatprep.subr.bf16.mxu0 0
      %2089 = vmatpush1.bf16.msra.mxu0 0
      %2090 = vmatprep.subr.bf16.mxu0 0
      %2091 = vmatpush1.bf16.msra.mxu0 0
      %2092 = vmatprep.subr.bf16.mxu0 0
      %2093 = vmatpush1.bf16.msra.mxu0 0
      %2094 = vmatprep.subr.bf16.mxu0 0
      %2095 = vmatpush1.bf16.msra.mxu0 0
      %2096 = vmatprep.subr.bf16.mxu0 0
      %2097 = vmatpush1.bf16.msra.mxu0 0
      %2098 = vmatprep.mubr.bf16.mxu0 0
      %2099 = vmatmul.mubr.bf16.gmra.mrb[0].mxu0 %v2009
      %v2100 = vpop.f32.mrb[0].mxu0
      %v2101 = vadd.f32 %v2016, %v2100
      %v2102 = vpop.f32.mrb[0].mxu0
      %v2103 = vpop.f32.mrb[0].mxu0
      %v2104 = vadd.f32 %v2016, %v2103
      %v2105 = vpop.f32.mrb[0].mxu0
      %2106 = vdwg.mxu0
      %v2107 = vadd.f32 %v2101, %v1480
      %v2108 = vadd.f32 %v2104, %v1481
      %s2109 = scalar_lea.vmem %s13, 1
      %v2110 = vld [vmem:[%s2109] sm:$0x1]
      %s2111 = scalar_lea.vmem %s14, 1
      %v2112 = vld [vmem:[%s2111] sm:$0x1]
      %v2113 = vsel %vm727, %v2107, 0.0
      %2114 = vadd.xlane.f32.xlu0 %v2113
      %v2115 = vpop.xlane.xlu0 %2114
      %v2116 = vsel %vm731, %v2108, 0.0
      %2117 = vadd.xlane.f32.xlu0 %v2116
      %v2118 = vpop.xlane.xlu0 %2117
      %v2119 = vmul.f32 %v2115, %v735
      %v2120 = vmul.f32 %v2118, %v735
      %v2121 = vsub.f32 %v2107, %v2119
      %v2122 = vsub.f32 %v2108, %v2120
      %v2123 = vmul.f32 %v2121, %v2121
      %v2124 = vmul.f32 %v2122, %v2122
      %v2125 = vsel %vm727, %v2123, 0.0
      %2126 = vadd.xlane.f32.xlu0 %v2125
      %v2127 = vpop.xlane.xlu0 %2126
      %v2128 = vsel %vm731, %v2124, 0.0
      %2129 = vadd.xlane.f32.xlu0 %v2128
      %v2130 = vpop.xlane.xlu0 %2129
      %v2131 = vmul.f32 %v2127, %v735
      %v2132 = vmul.f32 %v2130, %v735
      %v2133 = vadd.f32 %v2131, 1e-05
      %v2134 = vadd.f32 %v2132, 1e-05
      %v2135 = vrsqrt.pop %v2133
      %v2136 = vrsqrt.pop %v2134
      %v2137 = vmul.f32 %v2121, %v2135
      %v2138 = vmul.f32 %v2122, %v2136
      %v2140 = vlaneseq
      %v2141 = vshrl.u32 %v2140, 7
      %v2142 = vsub.s32 0, %v2141
      %v2143 = vrot.slane %v2110, %v2142
      %v2145 = vmul.f32 %v2137, %v2143
      %v2146 = vmul.f32 %v2138, %v2143
      %v2148 = vlaneseq
      %v2149 = vshrl.u32 %v2148, 7
      %v2150 = vsub.s32 0, %v2149
      %v2151 = vrot.slane %v2112, %v2150
      %v2153 = vadd.f32 %v2145, %v2151
      %v2154 = vadd.f32 %v2146, %v2151
      %s2155 = scalar_lea.vmem %s15, 16
      %v2156 = vld [vmem:[%s2155] sm:$0xf]
      %v2157 = vld [vmem:[%s2155 + $0x4] sm:$0xf]
      %v2158 = vld [vmem:[%s2155 + $0x8] sm:$0xf]
      %v2159 = vld [vmem:[%s2155 + $0xc] sm:$0xf]
      %v2160 = vpack.c.bf16 %v2154, %v2153
      %s2161 = scalar_lea.vmem %s16, 1
      %v2162 = vld [vmem:[%s2161] sm:$0x1]
      %v2164 = vlaneseq
      %v2165 = vshrl.u32 %v2164, 7
      %v2166 = vsub.s32 0, %v2165
      %v2167 = vrot.slane %v2162, %v2166
      %v2173 = vunpack.c.l.b16 %v2156
      %v2174 = vunpack.c.l.b16 %v2157
      %v2175 = vunpack.c.l.b16 %v2158
      %v2176 = vunpack.c.l.b16 %v2159
      %v2177 = vpack.c.b16 %v2174, %v2173
      %v2178 = vpack.c.b16 %v2176, %v2175
      %v2182 = vsel %vm727, %v2160, 0
      %2184 = vmatprep.subr.bf16.mxu0 0
      %2185 = vmatpush1.bf16.msra.mxu0 %v2177
      %2186 = vmatprep.subr.bf16.mxu0 0
      %2187 = vmatpush1.bf16.msra.mxu0 %v2178
      %2188 = vmatprep.subr.bf16.mxu0 0
      %2189 = vmatpush1.bf16.msra.mxu0 0
      %2190 = vmatprep.subr.bf16.mxu0 0
      %2191 = vmatpush1.bf16.msra.mxu0 0
      %2192 = vmatprep.subr.bf16.mxu0 0
      %2193 = vmatpush1.bf16.msra.mxu0 0
      %2194 = vmatprep.subr.bf16.mxu0 0
      %2195 = vmatpush1.bf16.msra.mxu0 0
      %2196 = vmatprep.subr.bf16.mxu0 0
      %2197 = vmatpush1.bf16.msra.mxu0 0
      %2198 = vmatprep.subr.bf16.mxu0 0
      %2199 = vmatpush1.bf16.msra.mxu0 0
      %2200 = vmatprep.subr.bf16.mxu0 0
      %2201 = vmatpush1.bf16.msra.mxu0 0
      %2202 = vmatprep.subr.bf16.mxu0 0
      %2203 = vmatpush1.bf16.msra.mxu0 0
      %2204 = vmatprep.subr.bf16.mxu0 0
      %2205 = vmatpush1.bf16.msra.mxu0 0
      %2206 = vmatprep.subr.bf16.mxu0 0
      %2207 = vmatpush1.bf16.msra.mxu0 0
      %2208 = vmatprep.subr.bf16.mxu0 0
      %2209 = vmatpush1.bf16.msra.mxu0 0
      %2210 = vmatprep.subr.bf16.mxu0 0
      %2211 = vmatpush1.bf16.msra.mxu0 0
      %2212 = vmatprep.subr.bf16.mxu0 0
      %2213 = vmatpush1.bf16.msra.mxu0 0
      %2214 = vmatprep.subr.bf16.mxu0 0
      %2215 = vmatpush1.bf16.msra.mxu0 0
      %2216 = vmatprep.mubr.bf16.mxu0 0
      %2217 = vmatmul.mubr.bf16.gmra.mrb[0].mxu0 %v2182
      %v2218 = vpop.f32.mrb[0].mxu0
      %v2219 = vadd.f32 %v2167, %v2218
      %v2220 = vpop.f32.mrb[0].mxu0
      %v2221 = vpop.f32.mrb[0].mxu0
      %v2222 = vadd.f32 %v2167, %v2221
      %v2223 = vpop.f32.mrb[0].mxu0
      %2224 = vdwg.mxu0
      %v2225 = vadd.f32 %v2219, %v2107
      %v2226 = vadd.f32 %v2222, %v2108
      %v2227 = vld [vmem:[%s17] sm:$0xf]
      %v2228 = vld [vmem:[%s17 + $0x4] sm:$0xf]
      %v2229 = vld [vmem:[%s17 + $0x8] sm:$0xf]
      %v2230 = vld [vmem:[%s17 + $0xc] sm:$0xf]
      %v2231 = vpack.c.bf16 %v2226, %v2225
      %v2232 = vld [vmem:[%s18] sm:$0x1]
      %v2234 = vlaneseq
      %v2235 = vshrl.u32 %v2234, 7
      %v2236 = vsub.s32 0, %v2235
      %v2237 = vrot.slane %v2232, %v2236
      %v2243 = vunpack.c.l.b16 %v2227
      %v2244 = vunpack.c.l.b16 %v2228
      %v2245 = vunpack.c.l.b16 %v2229
      %v2246 = vunpack.c.l.b16 %v2230
      %v2247 = vpack.c.b16 %v2244, %v2243
      %v2248 = vpack.c.b16 %v2246, %v2245
      %v2252 = vsel %vm727, %v2231, 0
      %2254 = vmatprep.subr.bf16.mxu0 0
      %2255 = vmatpush1.bf16.msra.mxu0 %v2247
      %2256 = vmatprep.subr.bf16.mxu0 0
      %2257 = vmatpush1.bf16.msra.mxu0 %v2248
      %2258 = vmatprep.subr.bf16.mxu0 0
      %2259 = vmatpush1.bf16.msra.mxu0 0
      %2260 = vmatprep.subr.bf16.mxu0 0
      %2261 = vmatpush1.bf16.msra.mxu0 0
      %2262 = vmatprep.subr.bf16.mxu0 0
      %2263 = vmatpush1.bf16.msra.mxu0 0
      %2264 = vmatprep.subr.bf16.mxu0 0
      %2265 = vmatpush1.bf16.msra.mxu0 0
      %2266 = vmatprep.subr.bf16.mxu0 0
      %2267 = vmatpush1.bf16.msra.mxu0 0
      %2268 = vmatprep.subr.bf16.mxu0 0
      %2269 = vmatpush1.bf16.msra.mxu0 0
      %2270 = vmatprep.subr.bf16.mxu0 0
      %2271 = vmatpush1.bf16.msra.mxu0 0
      %2272 = vmatprep.subr.bf16.mxu0 0
      %2273 = vmatpush1.bf16.msra.mxu0 0
      %2274 = vmatprep.subr.bf16.mxu0 0
      %2275 = vmatpush1.bf16.msra.mxu0 0
      %2276 = vmatprep.subr.bf16.mxu0 0
      %2277 = vmatpush1.bf16.msra.mxu0 0
      %2278 = vmatprep.subr.bf16.mxu0 0
      %2279 = vmatpush1.bf16.msra.mxu0 0
      %2280 = vmatprep.subr.bf16.mxu0 0
      %2281 = vmatpush1.bf16.msra.mxu0 0
      %2282 = vmatprep.subr.bf16.mxu0 0
      %2283 = vmatpush1.bf16.msra.mxu0 0
      %2284 = vmatprep.subr.bf16.mxu0 0
      %2285 = vmatpush1.bf16.msra.mxu0 0
      %2286 = vmatprep.mubr.bf16.mxu0 0
      %2287 = vmatmul.mubr.bf16.gmra.mrb[0].mxu0 %v2252
      %v2288 = vpop.f32.mrb[0].mxu0
      %v2289 = vadd.f32 %v2237, %v2288
      %v2290 = vpop.f32.mrb[0].mxu0
      %v2291 = vpop.f32.mrb[0].mxu0
      %v2292 = vadd.f32 %v2237, %v2291
      %v2293 = vpop.f32.mrb[0].mxu0
      %2294 = vdwg.mxu0
      %2295 = vst [vmem:[%s642] sm:$0xff] %v2289
      %2296 = vst [vmem:[%s642 + $0x8] sm:$0xf] %v2292
      %p2297 = scmp.lt.s32.totalorder %s30, 3
      %s2298 = scalar_select %p2297, %s30, 3
      %s2299 = smul.addr %s2298, 2
      %s2300 = smul.addr %s2299, 8
      %s2301 = scalar_lea.vmem %s19, %s2300
      // Predicated region
      $region97: #{forward_pallas.1} parent=95 // pred_check
        %p2302 = pneg %p462
      $region98: #{forward_pallas.1} parent=95 // pred_check_branch
        %2304 = sbr.rel (%p2302) target = $region100
      $region99: #{forward_pallas.1} parent=95 // pred_region
        _
      $region100: #{forward_pallas.1} parent=95 // pred_fallthru
        _
    $region96: #{forward_pallas.1} parent=5 // pred_fallthru
      _
    %p2305 = scmp.le.s32.totalorder 2, %s25
    // Predicated region
    $region101: #{forward_pallas.1} parent=5 // pred_check
      %p2306 = pneg %p2305
    $region102: #{forward_pallas.1} parent=5 // pred_check_branch
      %2308 = sbr.rel (%p2306) target = $region104
    $region103: #{forward_pallas.1} parent=5 // pred_region
      %s2309 = ssub.s32 %s25, 2
      // Predicated region
      $region105: #{forward_pallas.1} parent=103 // pred_check
        %p2310 = pneg %p468
      $region106: #{forward_pallas.1} parent=103 // pred_check_branch
        %2312 = sbr.rel (%p2310) target = $region108
      $region107: #{forward_pallas.1} parent=103 // pred_region
        %p2313 = scmp.lt.s32.totalorder %s31, 3
        %s2314 = scalar_select %p2313, %s31, 3
        %s2315 = smul.addr %s2314, 2
        %s2316 = smul.addr %s2315, 8
        %s2317 = scalar_lea.vmem %s19, %s2316
      $region108: #{forward_pallas.1} parent=103 // pred_fallthru
        _
    $region104: #{forward_pallas.1} parent=5 // pred_fallthru
      _
  $region6: #{forward_pallas.1} parent=0 // loop_footer
    %s29 = sadd.s32 1, %s25
  $region7: #{forward_pallas.1} parent=0 // loop_footer_branch
    %24 = sbr.rel target = $region3
  $region8: #{forward_pallas.1} parent=0 // loop_exit
    _

</llo_original>
